<compile_context>
chip_gen: v6e
topology: v6e:2x2x1
jax: 0.10.0
libtpu: 0.0.40
codegen_flags: <defaults>
</compile_context>

<pallas_src>
import functools

import jax
import jax.numpy as jnp
from jax.experimental import pallas as pl
from jax.experimental.pallas import tpu as pltpu


# ---------------------------------------------------------------------------
# Tiling heuristics
# ---------------------------------------------------------------------------
_TV_CANDIDATES = (512, 256, 128)      # prefer 512: fewer inner grid steps
_K_ALIGN = 128                        # contraction alignment (256 ideal v6e/v7x)
_VMEM_LIMIT = 48 * 1024 * 1024        # explicit scoped-VMEM limit (v7x: 64 MiB)
_VMEM_TILE_BUDGET = 40 * 1024 * 1024  # headroom under the limit for tile choice


def _round_up(x, m):
    return ((x + m - 1) // m) * m


def _choose_tiles(n_rows, d, v, *, desired_tm=1024):
    """Pick (tm, tv, mask_cols) for the fused log-prob kernel.

    tv: largest candidate dividing V (kills the per-step pad mask); otherwise
        the largest candidate with V padded + masked in the last vocab block.
    tm: as large as possible (intensity == tm flops per W byte), but
        - keep >= 2 row blocks when the problem allows (v7x: 2 TensorCores on
          the "parallel" row axis) and don't pad a tiny N up to a huge tile,
        - stay inside the VMEM budget (shrink tm, never tv, if D is huge).
    """
    tv = None
    for cand in _TV_CANDIDATES:
        if v % cand == 0:
            tv = cand
            break
    mask_cols = tv is None
    if tv is None:
        tv = _TV_CANDIDATES[0]

    dp = _round_up(d, _K_ALIGN)
    tm = min(desired_tm, max(128, _round_up(-(-n_rows // 2), 128)))

    def vmem_bytes(tm_):
        hid = 2 * tm_ * dp * 2          # double-buffered bf16 hidden blocks
        wgt = 2 * tv * dp * 2           # double-buffered bf16 W blocks
        logit = 3 * tm_ * tv * 4        # f32 logits staging + exp/cmp temps
        stats = 4 * tm_ * 4             # running stats + output block
        return hid + wgt + logit + stats

    while tm > 256 and vmem_bytes(tm) > _VMEM_TILE_BUDGET:
        tm //= 2
    return tm, tv, mask_cols


# ---------------------------------------------------------------------------
# Fused kernel: bf16 MXU matmul -> streaming logsumexp over the vocab grid
# axis -> target-logit gather.  Rows live in lanes throughout, so the stats
# and the (1, tm) output block are lane-dense.
# ---------------------------------------------------------------------------
def token_lp_kernel(h_ref, w_ref, tgt_ref, out_ref, m_sc, s_sc, pick_sc, *,
                    tv, v_total, mask_cols):
    j = pl.program_id(1)

    @pl.when(j == 0)
    def _():
        m_sc[...] = jnp.full_like(m_sc, -jnp.inf)
        s_sc[...] = jnp.zeros_like(s_sc)
        pick_sc[...] = jnp.zeros_like(pick_sc)

    # (tv, tm) f32 logits on the MXU: W block (tv, D) contracted with the
    # resident hidden block (tm, D) over D (q @ k^T form, f32 accumulation).
    logits = jax.lax.dot_general(
        w_ref[...], h_ref[...],
        dimension_numbers=(((1,), (1,)), ((), ())),
        preferred_element_type=jnp.float32)

    vocab_id = j * tv + jax.lax.broadcasted_iota(jnp.int32, logits.shape, 0)
    if mask_cols:
        # Fallback only when no tv in _TV_CANDIDATES divides V (padded vocab
        # rows live in the last j block).  The common path picks tv | V, so
        # this full-tile select is statically absent.
        logits = jnp.where(vocab_id < v_total, logits, -1e30)

    # Gather the target-token logit.  Each vocab block contains a row's target
    # at most once, and padded vocab ids (>= V) never match a real target.
    tgt = tgt_ref[...]                                            # (1, tm)
    pick_sc[...] = pick_sc[...] + jnp.sum(
        jnp.where(vocab_id == tgt, logits, 0.0), axis=0, keepdims=True)

    # Streaming logsumexp over the vocab axis.
    m_old = m_sc[...]
    m_new = jnp.maximum(m_old, jnp.max(logits, axis=0, keepdims=True))
    s_sc[...] = (s_sc[...] * jnp.exp(m_old - m_new)
                 + jnp.sum(jnp.exp(logits - m_new), axis=0, keepdims=True))
    m_sc[...] = m_new

    @pl.when(j == pl.num_programs(1) - 1)
    def _():
        lse = m_sc[...] + jnp.log(s_sc[...])
        out_ref[...] = pick_sc[...] - lse             # (1, tm), lane-dense


def token_logprobs(hidden, w, tokens, *, desired_tm=1024):
    """hidden: (N, D), w: (V, D) (nn.Linear layout), tokens: (N,) int.

    Returns (N,) f32 log p(token | row) without materializing (N, V).
    Rows are padded to a multiple of tm, V to a multiple of tv, D to 128.
    """
    N, D = hidden.shape
    V = w.shape[0]
    tm, tv, mask_cols = _choose_tiles(N, D, V, desired_tm=desired_tm)

    Np = _round_up(N, tm)
    Vp = _round_up(V, tv)
    Dp = _round_up(D, _K_ALIGN)

    h = hidden.astype(jnp.bfloat16)
    wt = w.astype(jnp.bfloat16)
    if Dp != D:                                   # zero-pad K: numerically exact
        h = jnp.pad(h, ((0, 0), (0, Dp - D)))
        wt = jnp.pad(wt, ((0, 0), (0, Dp - D)))
    if Np != N:
        h = jnp.pad(h, ((0, Np - N), (0, 0)))
    if Vp != V:
        wt = jnp.pad(wt, ((0, Vp - V), (0, 0)))
    tok = jnp.pad(tokens.reshape(-1).astype(jnp.int32), (0, Np - N))
    tok = tok.reshape(1, Np)

    G = Np // tm
    VB = Vp // tv

    kernel = functools.partial(token_lp_kernel, tv=tv, v_total=V,
                               mask_cols=mask_cols)
    out = pl.pallas_call(
        kernel,
        out_shape=jax.ShapeDtypeStruct((1, Np), jnp.float32),
        grid_spec=pltpu.PrefetchScalarGridSpec(
            num_scalar_prefetch=0,
            grid=(G, VB),
            in_specs=[
                # hidden block: resident across the whole inner vocab loop
                pl.BlockSpec((tm, Dp), lambda i, j: (i, 0)),
                # W block: streamed over the vocab axis (re-read once per row
                # block -> intensity = tm flops/byte; raise tm, not buffering)
                pl.BlockSpec((tv, Dp), lambda i, j: (j, 0)),
                # targets: rows live in lanes
                pl.BlockSpec((1, tm), lambda i, j: (0, i)),
            ],
            out_specs=pl.BlockSpec((1, tm), lambda i, j: (0, i)),
            scratch_shapes=[
                pltpu.VMEM((1, tm), jnp.float32),   # running max
                pltpu.VMEM((1, tm), jnp.float32),   # running sum-exp
                pltpu.VMEM((1, tm), jnp.float32),   # gathered target logit
            ],
        ),
        compiler_params=pltpu.CompilerParams(
            dimension_semantics=("parallel", "arbitrary"),
            vmem_limit_bytes=_VMEM_LIMIT),
    )(h, wt, tok)
    return out[0, :N]


# ---------------------------------------------------------------------------
# LanguageModelCriterion (reduction='mean'): masked mean in JAX over the
# fused per-token log-probs (single code path shared with the PPO branch).
# ---------------------------------------------------------------------------
def lm_criterion(hidden, w, targets, mask):
    lp = token_logprobs(hidden, w, targets)
    m = mask.reshape(-1).astype(jnp.float32)
    return jnp.sum(-lp * m) / jnp.maximum(jnp.sum(m), 1e-8)
    # TODO(synk): reduction='none' (drop_worst_flag) would return per-sequence
    # losses; not exercised here.


# ---------------------------------------------------------------------------
# PPO clipped surrogate (PPOCriterion): B scalars -> plain JAX, no kernel.
# ---------------------------------------------------------------------------
def ppo_criterion(old_agg, new_agg, score, clip_param):
    ratio = jnp.exp(new_agg - old_agg)
    surr1 = ratio * score
    surr2 = jnp.clip(ratio, 1.0 - clip_param, 1.0 + clip_param) * score
    return -jnp.mean(jnp.minimum(surr1, surr2))


# ---------------------------------------------------------------------------
# LossWrapper (forward only) with a small deterministic synthetic model
# ---------------------------------------------------------------------------
class PallasLossWrapper:
    def __init__(self, params, opt):
        self.params = params
        self.opt = opt

    def _hidden(self, fc_feats, tokens):
        # stand-in for self.model(...) hidden states; emitted in bf16 for MXU
        emb = self.params["E"][tokens]                      # (B, T, D)
        fc_h = fc_feats @ self.params["U"]                  # (B, D)
        return jnp.tanh(emb + fc_h[:, None, :]).astype(jnp.bfloat16)

    def forward(self, fc_feats, att_feats, labels, masks, att_masks,
                sc_flag, gen_result=None, score=None):
        out = {"gen_captions": [], "greedy_captions": []}
        if not sc_flag:
            # XE branch: LanguageModelCriterion with reduction='mean'
            h = self._hidden(fc_feats, labels[:, :-1])      # (B, T, D) bf16
            B, T, D = h.shape
            loss = lm_criterion(
                h.reshape(B * T, D),
                self.params["W"],                            # (V, D)
                labels[:, 1:].reshape(-1).astype(jnp.int32),
                masks[:, 1:].reshape(-1).astype(jnp.float32),
            )
            # TODO(synk): optimizer.zero_grad / backward / clip_gradient / step
            # are training-loop side effects with no Pallas forward equivalent.
        else:
            # PPO branch
            B, T = gen_result.shape
            D = self.params["U"].shape[1]
            toks = gen_result.reshape(-1).astype(jnp.int32)
            # shifted mask: t=0 always counted, t>0 counted iff prev token > 0
            shift_mask = jnp.concatenate(
                [jnp.ones((B, 1), jnp.float32),
                 (gen_result[:, :-1] > 0).astype(jnp.float32)], axis=1)

            # Single fused pass: with identical parameters the sampling-time
            # ("old", detached) and current ("new") log-probs are identical,
            # so compute once and stop_gradient for the old side (halves the
            # full-vocab W streaming of this branch).
            h = self._hidden(fc_feats, gen_result).reshape(B * T, D)
            lp = token_logprobs(h, self.params["W"], toks)
            agg = jnp.sum(lp.reshape(B, T) * shift_mask, axis=1)
            old_agg = jax.lax.stop_gradient(agg)
            new_agg = agg
            # TODO(synk): with a real optimizer stepping between ppo_iters the
            # "new" pass must be recomputed with updated parameters each iter.
            # TODO(synk): greedy decode, CIDEr reward model and caption
            # decoding are external python/model deps; `score` is supplied.

            loss = ppo_criterion(old_agg, new_agg,
                                 score.astype(jnp.float32),
                                 self.opt["ppo_clip_param"])
            out["reward"] = jnp.mean(score)
        out["loss"] = loss
        return out


# ---------------------------------------------------------------------------
# Pure-JAX references (for a light correctness check)
# ---------------------------------------------------------------------------
def _token_lp_ref(h_bf16, w_bf16, toks):
    logits = h_bf16.astype(jnp.float32) @ w_bf16.astype(jnp.float32).T
    lp = jax.nn.log_softmax(logits, axis=-1)
    idx = toks.reshape(-1, 1).astype(jnp.int32)
    return jnp.take_along_axis(lp, idx, axis=-1)[:, 0]


def _xe_ref(h_bf16, w_bf16, tgt, msk):
    lp = _token_lp_ref(h_bf16, w_bf16, tgt)
    return jnp.sum(-lp * msk) / jnp.sum(msk)


if __name__ == "__main__":
    key = jax.random.PRNGKey(0)
    B, Tlab, Dfc, D, V = 2, 9, 32, 32, 512     # labels has T+1 = 9 -> T = 8
    T = Tlab - 1
    ks = jax.random.split(key, 11)

    fc_feats = jax.random.normal(ks[0], (B, Dfc), jnp.float32)
    att_feats = jax.random.normal(ks[1], (B, 4, Dfc), jnp.float32)  # unused by synthetic model
    att_masks = jnp.ones((B, 4), jnp.float32)

    labels = jax.random.randint(ks[2], (B, Tlab), 1, V).astype(jnp.int32)
    labels = labels.at[:, 0].set(0)            # BOS
    labels = labels.at[0, 7:].set(0)           # shorter caption in row 0
    masks = (labels > 0).astype(jnp.float32)
    masks = masks.at[:, 0].set(1.0)

    gen_result = jax.random.randint(ks[3], (B, T), 0, V).astype(jnp.int32)
    gen_result = gen_result.at[1, 6:].set(0)   # early termination in row 1
    score = jax.random.normal(ks[4], (B,), jnp.float32)

    params = {
        "E": 0.1 * jax.random.normal(ks[5], (V, D), jnp.float32),
        "U": 0.1 * jax.random.normal(ks[6], (Dfc, D), jnp.float32),
        # vocab projection in nn.Linear layout (V, D), bf16 for the MXU
        "W": (0.1 * jax.random.normal(ks[7], (V, D), jnp.float32)
              ).astype(jnp.bfloat16),
    }
    opt = {"ppo_clip_param": 0.2, "do_not_use_ppo": False}

    wrapper = PallasLossWrapper(params, opt)

    out_xe = wrapper.forward(fc_feats, att_feats, labels, masks, att_masks,
                             sc_flag=False)
    out_sc = wrapper.forward(fc_feats, att_feats, labels, masks, att_masks,
                             sc_flag=True, gen_result=gen_result, score=score)
    jax.block_until_ready((out_xe["loss"], out_sc["loss"]))

    # --- correctness: XE branch vs pure-JAX reference --------------------
    h_xe = wrapper._hidden(fc_feats, labels[:, :-1]).reshape(B * T, D)
    ref_xe = _xe_ref(h_xe, params["W"],
                     labels[:, 1:].reshape(-1).astype(jnp.int32),
                     masks[:, 1:].reshape(-1).astype(jnp.float32))
    assert jnp.allclose(out_xe["loss"], ref_xe, rtol=2e-3, atol=2e-3), \
        (out_xe["loss"], ref_xe)

    # --- correctness: PPO branch token log-probs + degenerate surrogate --
    h_sc = wrapper._hidden(fc_feats, gen_result).reshape(B * T, D)
    toks = gen_result.reshape(-1).astype(jnp.int32)
    lp_kernel = token_logprobs(h_sc, params["W"], toks)
    lp_ref = _token_lp_ref(h_sc, params["W"], toks)
    assert jnp.allclose(lp_kernel, lp_ref, rtol=2e-3, atol=2e-3)
    assert jnp.allclose(out_sc["loss"], -jnp.mean(score), rtol=1e-5, atol=1e-5)

    # --- correctness: larger standalone shapes that exercise G>=2 row
    # blocks, several vocab blocks, row padding and K padding --------------
    N2, D2, V2 = 300, 32, 640
    h2 = (0.3 * jax.random.normal(ks[8], (N2, D2), jnp.float32)
          ).astype(jnp.bfloat16)
    w2 = (0.1 * jax.random.normal(ks[9], (V2, D2), jnp.float32)
          ).astype(jnp.bfloat16)
    t2 = jax.random.randint(ks[10], (N2,), 0, V2).astype(jnp.int32)
    lp2 = token_logprobs(h2, w2, t2)
    jax.block_until_ready(lp2)
    lp2_ref = _token_lp_ref(h2, w2, t2)
    assert jnp.allclose(lp2, lp2_ref, rtol=2e-3, atol=2e-3)

    print("KERNEL_OK")
</pallas_src>

<mosaic_0001>
module attributes {stable_mosaic.version = 11 : i64} {
  func.func @token_lp_kernel(%arg0: i32, %arg1: i32, %arg2: memref<128x128xbf16, #tpu.memory_space<vmem>>, %arg3: memref<512x128xbf16, #tpu.memory_space<vmem>>, %arg4: memref<1x128xi32, #tpu.memory_space<vmem>>, %arg5: memref<1x128xf32, #tpu.memory_space<vmem>>, %arg6: memref<1x128xf32, #tpu.memory_space<vmem>>, %arg7: memref<1x128xf32, #tpu.memory_space<vmem>>, %arg8: memref<1x128xf32, #tpu.memory_space<vmem>>) attributes {dimension_semantics = [#tpu.dimension_semantics<parallel>, #tpu.dimension_semantics<arbitrary>], iteration_bounds = array<i64: 1, 1>, scalar_prefetch = 0 : i64, scratch_operands = 3 : i64, tpu.core_type = #tpu.core_type<tc>, window_params = [{transform_indices = @transform_0, window_bounds = array<i64: 128, 128>}, {transform_indices = @transform_1, window_bounds = array<i64: 512, 128>}, {transform_indices = @transform_2, window_bounds = array<i64: 1, 128>}, {transform_indices = @transform_3, window_bounds = array<i64: 1, 128>}]} {
    %c0_i32 = arith.constant 0 : i32
    %0 = arith.cmpi eq, %arg1, %c0_i32 : i32
    %1 = arith.extui %0 : i1 to i32
    %c0_i32_0 = arith.constant 0 : i32
    %2 = arith.cmpi ne, %1, %c0_i32_0 : i32
    scf.if %2 {
      %cst_24 = arith.constant 0xFF800000 : f32
      %39 = vector.broadcast %cst_24 : f32 to vector<1x128xf32>
      %c0_25 = arith.constant 0 : index
      %c0_26 = arith.constant 0 : index
      %40 = vector.load %arg6[%c0_25, %c0_26] : memref<1x128xf32, #tpu.memory_space<vmem>>, vector<1x128xf32>
      tpu.vector_store %arg6[%c0_25, %c0_26], %39 {strides = array<i32>} : memref<1x128xf32, #tpu.memory_space<vmem>>, vector<1x128xf32>,
      %cst_27 = arith.constant 0.000000e+00 : f32
      %41 = vector.broadcast %cst_27 : f32 to vector<1x128xf32>
      %c0_28 = arith.constant 0 : index
      %c0_29 = arith.constant 0 : index
      %42 = vector.load %arg7[%c0_28, %c0_29] : memref<1x128xf32, #tpu.memory_space<vmem>>, vector<1x128xf32>
      tpu.vector_store %arg7[%c0_28, %c0_29], %41 {strides = array<i32>} : memref<1x128xf32, #tpu.memory_space<vmem>>, vector<1x128xf32>,
      %cst_30 = arith.constant 0.000000e+00 : f32
      %43 = vector.broadcast %cst_30 : f32 to vector<1x128xf32>
      %c0_31 = arith.constant 0 : index
      %c0_32 = arith.constant 0 : index
      %44 = vector.load %arg8[%c0_31, %c0_32] : memref<1x128xf32, #tpu.memory_space<vmem>>, vector<1x128xf32>
      tpu.vector_store %arg8[%c0_31, %c0_32], %43 {strides = array<i32>} : memref<1x128xf32, #tpu.memory_space<vmem>>, vector<1x128xf32>,
    } else {
    }
    %c0 = arith.constant 0 : index
    %c0_1 = arith.constant 0 : index
    %3 = vector.load %arg3[%c0, %c0_1] : memref<512x128xbf16, #tpu.memory_space<vmem>>, vector<512x128xbf16>
    %c0_2 = arith.constant 0 : index
    %c0_3 = arith.constant 0 : index
    %4 = vector.load %arg2[%c0_2, %c0_3] : memref<128x128xbf16, #tpu.memory_space<vmem>>, vector<128x128xbf16>
    %cst = arith.constant dense<0.000000e+00> : vector<512x128xf32>
    %5 = tpu.matmul %3, %4, %cst {dimension_numbers = #tpu.dot_dimension_numbers<[1], [1], [0], [0], [0, 0, 1, 0], [], []>} : vector<512x128xbf16>, vector<128x128xbf16>, vector<512x128xf32> -> vector<512x128xf32>
    %c512_i32 = arith.constant 512 : i32
    %6 = arith.muli %arg1, %c512_i32 : i32
    %7 = tpu.iota {dimensions = array<i32: 0>} : vector<512x128xi32>
    %8 = vector.broadcast %6 : i32 to vector<512x128xi32>
    %9 = arith.addi %8, %7 : vector<512x128xi32>
    %c0_4 = arith.constant 0 : index
    %c0_5 = arith.constant 0 : index
    %10 = vector.load %arg4[%c0_4, %c0_5] : memref<1x128xi32, #tpu.memory_space<vmem>>, vector<1x128xi32>
    %c0_6 = arith.constant 0 : index
    %c0_7 = arith.constant 0 : index
    %11 = vector.load %arg8[%c0_6, %c0_7] : memref<1x128xf32, #tpu.memory_space<vmem>>, vector<1x128xf32>
    %12 = vector.broadcast %10 : vector<1x128xi32> to vector<512x128xi32>
    %13 = arith.cmpi eq, %9, %12 : vector<512x128xi32>
    %cst_8 = arith.constant 0.000000e+00 : f32
    %14 = vector.broadcast %cst_8 : f32 to vector<512x128xf32>
    %15 = arith.select %13, %5, %14 : vector<512x128xi1>, vector<512x128xf32>
    %cst_9 = arith.constant dense<0.000000e+00> : vector<128xf32>
    %16 = vector.multi_reduction <add>, %15, %cst_9 [0] : vector<512x128xf32> to vector<128xf32>
    %17 = vector.shape_cast %16 : vector<128xf32> to vector<1x128xf32>
    %18 = arith.addf %11, %17 : vector<1x128xf32>
    %c0_10 = arith.constant 0 : index
    %c0_11 = arith.constant 0 : index
    %19 = vector.load %arg8[%c0_10, %c0_11] : memref<1x128xf32, #tpu.memory_space<vmem>>, vector<1x128xf32>
    tpu.vector_store %arg8[%c0_10, %c0_11], %18 {strides = array<i32>} : memref<1x128xf32, #tpu.memory_space<vmem>>, vector<1x128xf32>,
    %c0_12 = arith.constant 0 : index
    %c0_13 = arith.constant 0 : index
    %20 = vector.load %arg6[%c0_12, %c0_13] : memref<1x128xf32, #tpu.memory_space<vmem>>, vector<1x128xf32>
    %cst_14 = arith.constant dense<0xFF800000> : vector<128xf32>
    %21 = vector.multi_reduction <maximumf>, %5, %cst_14 [0] : vector<512x128xf32> to vector<128xf32>
    %22 = vector.shape_cast %21 : vector<128xf32> to vector<1x128xf32>
    %23 = arith.maximumf %20, %22 : vector<1x128xf32>
    %c0_15 = arith.constant 0 : index
    %c0_16 = arith.constant 0 : index
    %24 = vector.load %arg7[%c0_15, %c0_16] : memref<1x128xf32, #tpu.memory_space<vmem>>, vector<1x128xf32>
    %25 = arith.subf %20, %23 : vector<1x128xf32>
    %26 = math.exp %25 : vector<1x128xf32>
    %27 = arith.mulf %24, %26 : vector<1x128xf32>
    %28 = vector.broadcast %23 : vector<1x128xf32> to vector<512x128xf32>
    %29 = arith.subf %5, %28 : vector<512x128xf32>
    %30 = math.exp %29 : vector<512x128xf32>
    %cst_17 = arith.constant dense<0.000000e+00> : vector<128xf32>
    %31 = vector.multi_reduction <add>, %30, %cst_17 [0] : vector<512x128xf32> to vector<128xf32>
    %32 = vector.shape_cast %31 : vector<128xf32> to vector<1x128xf32>
    %33 = arith.addf %27, %32 : vector<1x128xf32>
    %c0_18 = arith.constant 0 : index
    %c0_19 = arith.constant 0 : index
    %34 = vector.load %arg7[%c0_18, %c0_19] : memref<1x128xf32, #tpu.memory_space<vmem>>, vector<1x128xf32>
    tpu.vector_store %arg7[%c0_18, %c0_19], %33 {strides = array<i32>} : memref<1x128xf32, #tpu.memory_space<vmem>>, vector<1x128xf32>,
    %c0_20 = arith.constant 0 : index
    %c0_21 = arith.constant 0 : index
    %35 = vector.load %arg6[%c0_20, %c0_21] : memref<1x128xf32, #tpu.memory_space<vmem>>, vector<1x128xf32>
    tpu.vector_store %arg6[%c0_20, %c0_21], %23 {strides = array<i32>} : memref<1x128xf32, #tpu.memory_space<vmem>>, vector<1x128xf32>,
    %c0_i32_22 = arith.constant 0 : i32
    %36 = arith.cmpi eq, %arg1, %c0_i32_22 : i32
    %37 = arith.extui %36 : i1 to i32
    %c0_i32_23 = arith.constant 0 : i32
    %38 = arith.cmpi ne, %37, %c0_i32_23 : i32
    scf.if %38 {
      %c0_24 = arith.constant 0 : index
      %c0_25 = arith.constant 0 : index
      %39 = vector.load %arg6[%c0_24, %c0_25] : memref<1x128xf32, #tpu.memory_space<vmem>>, vector<1x128xf32>
      %c0_26 = arith.constant 0 : index
      %c0_27 = arith.constant 0 : index
      %40 = vector.load %arg7[%c0_26, %c0_27] : memref<1x128xf32, #tpu.memory_space<vmem>>, vector<1x128xf32>
      %41 = math.log %40 : vector<1x128xf32>
      %42 = arith.addf %39, %41 : vector<1x128xf32>
      %c0_28 = arith.constant 0 : index
      %c0_29 = arith.constant 0 : index
      %43 = vector.load %arg8[%c0_28, %c0_29] : memref<1x128xf32, #tpu.memory_space<vmem>>, vector<1x128xf32>
      %44 = arith.subf %43, %42 : vector<1x128xf32>
      %c0_30 = arith.constant 0 : index
      %c0_31 = arith.constant 0 : index
      %45 = vector.load %arg5[%c0_30, %c0_31] : memref<1x128xf32, #tpu.memory_space<vmem>>, vector<1x128xf32>
      tpu.vector_store %arg5[%c0_30, %c0_31], %44 {strides = array<i32>} : memref<1x128xf32, #tpu.memory_space<vmem>>, vector<1x128xf32>,
    } else {
    }
    return
  }
  func.func @transform_0(%arg0: i32, %arg1: i32) -> (i32, i32) {
    %c0_i32 = arith.constant 0 : i32
    %c0_i32_0 = arith.constant 0 : i32
    return %arg0, %c0_i32 : i32, i32
  }
  func.func @transform_1(%arg0: i32, %arg1: i32) -> (i32, i32) {
    %c0_i32 = arith.constant 0 : i32
    %c0_i32_0 = arith.constant 0 : i32
    return %arg1, %c0_i32 : i32, i32
  }
  func.func @transform_2(%arg0: i32, %arg1: i32) -> (i32, i32) {
    %c0_i32 = arith.constant 0 : i32
    %c0_i32_0 = arith.constant 0 : i32
    return %c0_i32, %arg0 : i32, i32
  }
  func.func @transform_3(%arg0: i32, %arg1: i32) -> (i32, i32) {
    %c0_i32 = arith.constant 0 : i32
    %c0_i32_0 = arith.constant 0 : i32
    return %c0_i32, %arg0 : i32, i32
  }
}

</mosaic_0001>

<llo_original>
// kernel: tpu_custom_call.1
$region0: #{tpu_custom_call.1}
  #allocation0 [shape = 'u32[]', space=smem, size = 0x4, offset = 0x4, fixed_abs, tag = 'smem constant byte address 0x4 - core index']
  #allocation1 [shape = 'u32[144,128]{1,0:T(1,128)}', space=vmem, size = 0x12000, scoped, tag = 'internal scratch']
  #allocation2 [shape = 'f32[1,128]{1,0:T(1,128)}', space=vmem, size = 0x200, scoped, tag = 'scratch operand']
  #allocation3 [shape = 'f32[1,128]{1,0:T(1,128)}', space=vmem, size = 0x200, scoped, tag = 'scratch operand']
  #allocation4 [shape = 'f32[1,128]{1,0:T(1,128)}', space=vmem, size = 0x200, scoped, tag = 'scratch operand']
  %s0 = inlined_call_operand.hbm [shape: bf16[128,128], index: 0, kind: input, shape index: {}]
  %s1 = inlined_call_operand.hbm [shape: bf16[512,128], index: 1, kind: input, shape index: {}]
  %s2 = inlined_call_operand.vmem [shape: s32[1,128], index: 2, kind: input, shape index: {}]
  %s3 = inlined_call_operand.hbm [shape: f32[1,128], index: 3, kind: output, shape index: {}]
  %s4 = sld [smem:[#allocation0]]
  $region38: #{tpu_custom_call.1} parent=0
    _
  %s6 = ssub.s32 1, %s4
  %s7 = scalar_select 0, %s6, %s4
  $region1: #{tpu_custom_call.1} parent=0
    #allocation5 [shape = 'u8[32768]{0}', space=vmem, size = 0x8000, scoped, tag = 'input window, operand 0, single buffered']
    #allocation6 [shape = 's32[1]{0}', space=sflag, size = 0x4, scoped, tag = 'scoped memory for tpu_custom_call.1']
    #allocation7 [shape = 's32[1]{0}', space=sflag, size = 0x4, scoped, tag = 'scoped memory for tpu_custom_call.1']
    #allocation8 [shape = 'u8[131072]{0}', space=vmem, size = 0x20000, scoped, tag = 'input window, operand 1, single buffered']
    #allocation9 [shape = 's32[1]{0}', space=sflag, size = 0x4, scoped, tag = 'scoped memory for tpu_custom_call.1']
    #allocation10 [shape = 'u8[512]{0}', space=vmem, size = 0x400, scoped, tag = 'output window, operand 0, single buffered']
    %8 = vsyncpa [#allocation6], 0
    %9 = vsyncpa [#allocation9], 0
    %10 = vsyncpa [#allocation7], 0
    // Predicated region
    $region2: #{tpu_custom_call.1} parent=1 // pred_check
      _
    $region3: #{tpu_custom_call.1} parent=1 // pred_check_branch
      %12 = sbr.rel (0) target = $region5
    $region4: #{tpu_custom_call.1} parent=1 // pred_region
      %s14 = ssub.s32 1024, 1024
      %15 = vsyncadd [#allocation6], %s14
      %s16 = sshll.u32 [#allocation5], 4
      %s17 = int_to_ptr.vmem [resolvable:$true] %s16
      %22 = dma.hbm_to_vmem [thread:$0]  %s0, 1024, %s17, [#allocation6], 64, 64, 4
    $region5: #{tpu_custom_call.1} parent=1 // pred_fallthru
      _
    // Predicated region
    $region6: #{tpu_custom_call.1} parent=1 // pred_check
      _
    $region7: #{tpu_custom_call.1} parent=1 // pred_check_branch
      %24 = sbr.rel (0) target = $region9
    $region8: #{tpu_custom_call.1} parent=1 // pred_region
      %s26 = ssub.s32 4096, 4096
      %27 = vsyncadd [#allocation9], %s26
      %s28 = sshll.u32 [#allocation8], 4
      %s29 = int_to_ptr.vmem [resolvable:$true] %s28
      %34 = dma.hbm_to_vmem [thread:$0]  %s1, 4096, %s29, [#allocation9], 64, 64, 4
    $region9: #{tpu_custom_call.1} parent=1 // pred_fallthru
      _
    // Predicated region
    $region10: #{tpu_custom_call.1} parent=1 // pred_check
      _
    $region11: #{tpu_custom_call.1} parent=1 // pred_check_branch
      %36 = sbr.rel (0) target = $region13
    $region12: #{tpu_custom_call.1} parent=1 // pred_region
      _
    $region13: #{tpu_custom_call.1} parent=1 // pred_fallthru
      _
    // Predicated region
    $region14: #{tpu_custom_call.1} parent=1 // pred_check
      _
    $region15: #{tpu_custom_call.1} parent=1 // pred_check_branch
      %38 = sbr.rel (0) target = $region17
    $region16: #{tpu_custom_call.1} parent=1 // pred_region
      %39 = dma.done [#allocation6], 1024
    $region17: #{tpu_custom_call.1} parent=1 // pred_fallthru
      _
    // Predicated region
    $region18: #{tpu_custom_call.1} parent=1 // pred_check
      _
    $region19: #{tpu_custom_call.1} parent=1 // pred_check_branch
      %41 = sbr.rel (0) target = $region21
    $region20: #{tpu_custom_call.1} parent=1 // pred_region
      %42 = dma.done [#allocation9], 4096
    $region21: #{tpu_custom_call.1} parent=1 // pred_fallthru
      _
    %p44 = scmp.eq.s32.totalorder 0, 0
    // Predicated region
    $region22: #{tpu_custom_call.1} parent=1 // pred_check
      %p45 = pneg %p44
    $region23: #{tpu_custom_call.1} parent=1 // pred_check_branch
      %47 = sbr.rel (%p45) target = $region25
    $region24: #{tpu_custom_call.1} parent=1 // pred_region
      %48 = vst [vmem:[#allocation2] sm:$0x1] -inf
      %49 = vst [vmem:[#allocation3] sm:$0x1] 0.0
      %50 = vst [vmem:[#allocation4] sm:$0x1] 0.0
    $region25: #{tpu_custom_call.1} parent=1 // pred_fallthru
      _
    %v51 = vld [vmem:[#allocation8] sm:$0xf]
    %v52 = vld [vmem:[#allocation8 + $0x4] sm:$0xf]
    %v53 = vld [vmem:[#allocation8 + $0x8] sm:$0xf]
    %v54 = vld [vmem:[#allocation8 + $0xc] sm:$0xf]
    %v55 = vld [vmem:[#allocation8 + $0x10] sm:$0xf]
    %v56 = vld [vmem:[#allocation8 + $0x14] sm:$0xf]
    %v57 = vld [vmem:[#allocation8 + $0x18] sm:$0xf]
    %v58 = vld [vmem:[#allocation8 + $0x1c] sm:$0xf]
    %v59 = vld [vmem:[#allocation8 + $0x20] sm:$0xf]
    %v60 = vld [vmem:[#allocation8 + $0x24] sm:$0xf]
    %v61 = vld [vmem:[#allocation8 + $0x28] sm:$0xf]
    %v62 = vld [vmem:[#allocation8 + $0x2c] sm:$0xf]
    %v63 = vld [vmem:[#allocation8 + $0x30] sm:$0xf]
    %v64 = vld [vmem:[#allocation8 + $0x34] sm:$0xf]
    %v65 = vld [vmem:[#allocation8 + $0x38] sm:$0xf]
    %v66 = vld [vmem:[#allocation8 + $0x3c] sm:$0xf]
    %v67 = vld [vmem:[#allocation8 + $0x40] sm:$0xf]
    %v68 = vld [vmem:[#allocation8 + $0x44] sm:$0xf]
    %v69 = vld [vmem:[#allocation8 + $0x48] sm:$0xf]
    %v70 = vld [vmem:[#allocation8 + $0x4c] sm:$0xf]
    %v71 = vld [vmem:[#allocation8 + $0x50] sm:$0xf]
    %v72 = vld [vmem:[#allocation8 + $0x54] sm:$0xf]
    %v73 = vld [vmem:[#allocation8 + $0x58] sm:$0xf]
    %v74 = vld [vmem:[#allocation8 + $0x5c] sm:$0xf]
    %v75 = vld [vmem:[#allocation8 + $0x60] sm:$0xf]
    %v76 = vld [vmem:[#allocation8 + $0x64] sm:$0xf]
    %v77 = vld [vmem:[#allocation8 + $0x68] sm:$0xf]
    %v78 = vld [vmem:[#allocation8 + $0x6c] sm:$0xf]
    %v79 = vld [vmem:[#allocation8 + $0x70] sm:$0xf]
    %v80 = vld [vmem:[#allocation8 + $0x74] sm:$0xf]
    %v81 = vld [vmem:[#allocation8 + $0x78] sm:$0xf]
    %v82 = vld [vmem:[#allocation8 + $0x7c] sm:$0xf]
    %v83 = vld [vmem:[#allocation8 + $0x80] sm:$0xf]
    %v84 = vld [vmem:[#allocation8 + $0x84] sm:$0xf]
    %v85 = vld [vmem:[#allocation8 + $0x88] sm:$0xf]
    %v86 = vld [vmem:[#allocation8 + $0x8c] sm:$0xf]
    %v87 = vld [vmem:[#allocation8 + $0x90] sm:$0xf]
    %v88 = vld [vmem:[#allocation8 + $0x94] sm:$0xf]
    %v89 = vld [vmem:[#allocation8 + $0x98] sm:$0xf]
    %v90 = vld [vmem:[#allocation8 + $0x9c] sm:$0xf]
    %v91 = vld [vmem:[#allocation8 + $0xa0] sm:$0xf]
    %v92 = vld [vmem:[#allocation8 + $0xa4] sm:$0xf]
    %v93 = vld [vmem:[#allocation8 + $0xa8] sm:$0xf]
    %v94 = vld [vmem:[#allocation8 + $0xac] sm:$0xf]
    %v95 = vld [vmem:[#allocation8 + $0xb0] sm:$0xf]
    %v96 = vld [vmem:[#allocation8 + $0xb4] sm:$0xf]
    %v97 = vld [vmem:[#allocation8 + $0xb8] sm:$0xf]
    %v98 = vld [vmem:[#allocation8 + $0xbc] sm:$0xf]
    %v99 = vld [vmem:[#allocation8 + $0xc0] sm:$0xf]
    %v100 = vld [vmem:[#allocation8 + $0xc4] sm:$0xf]
    %v101 = vld [vmem:[#allocation8 + $0xc8] sm:$0xf]
    %v102 = vld [vmem:[#allocation8 + $0xcc] sm:$0xf]
    %v103 = vld [vmem:[#allocation8 + $0xd0] sm:$0xf]
    %v104 = vld [vmem:[#allocation8 + $0xd4] sm:$0xf]
    %v105 = vld [vmem:[#allocation8 + $0xd8] sm:$0xf]
    %v106 = vld [vmem:[#allocation8 + $0xdc] sm:$0xf]
    %v107 = vld [vmem:[#allocation8 + $0xe0] sm:$0xf]
    %v108 = vld [vmem:[#allocation8 + $0xe4] sm:$0xf]
    %v109 = vld [vmem:[#allocation8 + $0xe8] sm:$0xf]
    %v110 = vld [vmem:[#allocation8 + $0xec] sm:$0xf]
    %v111 = vld [vmem:[#allocation8 + $0xf0] sm:$0xf]
    %v112 = vld [vmem:[#allocation8 + $0xf4] sm:$0xf]
    %v113 = vld [vmem:[#allocation8 + $0xf8] sm:$0xf]
    %v114 = vld [vmem:[#allocation8 + $0xfc] sm:$0xf]
    %v115 = vld [vmem:[#allocation5] sm:$0xf]
    %v116 = vld [vmem:[#allocation5 + $0x4] sm:$0xf]
    %v117 = vld [vmem:[#allocation5 + $0x8] sm:$0xf]
    %v118 = vld [vmem:[#allocation5 + $0xc] sm:$0xf]
    %v119 = vld [vmem:[#allocation5 + $0x10] sm:$0xf]
    %v120 = vld [vmem:[#allocation5 + $0x14] sm:$0xf]
    %v121 = vld [vmem:[#allocation5 + $0x18] sm:$0xf]
    %v122 = vld [vmem:[#allocation5 + $0x1c] sm:$0xf]
    %v123 = vld [vmem:[#allocation5 + $0x20] sm:$0xf]
    %v124 = vld [vmem:[#allocation5 + $0x24] sm:$0xf]
    %v125 = vld [vmem:[#allocation5 + $0x28] sm:$0xf]
    %v126 = vld [vmem:[#allocation5 + $0x2c] sm:$0xf]
    %v127 = vld [vmem:[#allocation5 + $0x30] sm:$0xf]
    %v128 = vld [vmem:[#allocation5 + $0x34] sm:$0xf]
    %v129 = vld [vmem:[#allocation5 + $0x38] sm:$0xf]
    %v130 = vld [vmem:[#allocation5 + $0x3c] sm:$0xf]
    %v195 = vunpack.c.l.b16 %v51
    %v196 = vunpack.c.l.b16 %v52
    %v197 = vunpack.c.l.b16 %v53
    %v198 = vunpack.c.l.b16 %v54
    %v199 = vunpack.c.l.b16 %v55
    %v200 = vunpack.c.l.b16 %v56
    %v201 = vunpack.c.l.b16 %v57
    %v202 = vunpack.c.l.b16 %v58
    %v203 = vunpack.c.l.b16 %v59
    %v204 = vunpack.c.l.b16 %v60
    %v205 = vunpack.c.l.b16 %v61
    %v206 = vunpack.c.l.b16 %v62
    %v207 = vunpack.c.l.b16 %v63
    %v208 = vunpack.c.l.b16 %v64
    %v209 = vunpack.c.l.b16 %v65
    %v210 = vunpack.c.l.b16 %v66
    %v211 = vunpack.c.l.b16 %v67
    %v212 = vunpack.c.l.b16 %v68
    %v213 = vunpack.c.l.b16 %v69
    %v214 = vunpack.c.l.b16 %v70
    %v215 = vunpack.c.l.b16 %v71
    %v216 = vunpack.c.l.b16 %v72
    %v217 = vunpack.c.l.b16 %v73
    %v218 = vunpack.c.l.b16 %v74
    %v219 = vunpack.c.l.b16 %v75
    %v220 = vunpack.c.l.b16 %v76
    %v221 = vunpack.c.l.b16 %v77
    %v222 = vunpack.c.l.b16 %v78
    %v223 = vunpack.c.l.b16 %v79
    %v224 = vunpack.c.l.b16 %v80
    %v225 = vunpack.c.l.b16 %v81
    %v226 = vunpack.c.l.b16 %v82
    %v227 = vunpack.c.l.b16 %v83
    %v228 = vunpack.c.l.b16 %v84
    %v229 = vunpack.c.l.b16 %v85
    %v230 = vunpack.c.l.b16 %v86
    %v231 = vunpack.c.l.b16 %v87
    %v232 = vunpack.c.l.b16 %v88
    %v233 = vunpack.c.l.b16 %v89
    %v234 = vunpack.c.l.b16 %v90
    %v235 = vunpack.c.l.b16 %v91
    %v236 = vunpack.c.l.b16 %v92
    %v237 = vunpack.c.l.b16 %v93
    %v238 = vunpack.c.l.b16 %v94
    %v239 = vunpack.c.l.b16 %v95
    %v240 = vunpack.c.l.b16 %v96
    %v241 = vunpack.c.l.b16 %v97
    %v242 = vunpack.c.l.b16 %v98
    %v243 = vunpack.c.l.b16 %v99
    %v244 = vunpack.c.l.b16 %v100
    %v245 = vunpack.c.l.b16 %v101
    %v246 = vunpack.c.l.b16 %v102
    %v247 = vunpack.c.l.b16 %v103
    %v248 = vunpack.c.l.b16 %v104
    %v249 = vunpack.c.l.b16 %v105
    %v250 = vunpack.c.l.b16 %v106
    %v251 = vunpack.c.l.b16 %v107
    %v252 = vunpack.c.l.b16 %v108
    %v253 = vunpack.c.l.b16 %v109
    %v254 = vunpack.c.l.b16 %v110
    %v255 = vunpack.c.l.b16 %v111
    %v256 = vunpack.c.l.b16 %v112
    %v257 = vunpack.c.l.b16 %v113
    %v258 = vunpack.c.l.b16 %v114
    %v259 = vpack.c.b16 %v196, %v195
    %v260 = vpack.c.b16 %v198, %v197
    %v261 = vpack.c.b16 %v200, %v199
    %v262 = vpack.c.b16 %v202, %v201
    %v263 = vpack.c.b16 %v204, %v203
    %v264 = vpack.c.b16 %v206, %v205
    %v265 = vpack.c.b16 %v208, %v207
    %v266 = vpack.c.b16 %v210, %v209
    %v267 = vpack.c.b16 %v212, %v211
    %v268 = vpack.c.b16 %v214, %v213
    %v269 = vpack.c.b16 %v216, %v215
    %v270 = vpack.c.b16 %v218, %v217
    %v271 = vpack.c.b16 %v220, %v219
    %v272 = vpack.c.b16 %v222, %v221
    %v273 = vpack.c.b16 %v224, %v223
    %v274 = vpack.c.b16 %v226, %v225
    %v275 = vpack.c.b16 %v228, %v227
    %v276 = vpack.c.b16 %v230, %v229
    %v277 = vpack.c.b16 %v232, %v231
    %v278 = vpack.c.b16 %v234, %v233
    %v279 = vpack.c.b16 %v236, %v235
    %v280 = vpack.c.b16 %v238, %v237
    %v281 = vpack.c.b16 %v240, %v239
    %v282 = vpack.c.b16 %v242, %v241
    %v283 = vpack.c.b16 %v244, %v243
    %v284 = vpack.c.b16 %v246, %v245
    %v285 = vpack.c.b16 %v248, %v247
    %v286 = vpack.c.b16 %v250, %v249
    %v287 = vpack.c.b16 %v252, %v251
    %v288 = vpack.c.b16 %v254, %v253
    %v289 = vpack.c.b16 %v256, %v255
    %v290 = vpack.c.b16 %v258, %v257
    %v339 = vunpack.c.l.b16 %v115
    %v340 = vunpack.c.l.b16 %v116
    %v341 = vunpack.c.l.b16 %v117
    %v342 = vunpack.c.l.b16 %v118
    %v343 = vunpack.c.l.b16 %v119
    %v344 = vunpack.c.l.b16 %v120
    %v345 = vunpack.c.l.b16 %v121
    %v346 = vunpack.c.l.b16 %v122
    %v347 = vunpack.c.l.b16 %v123
    %v348 = vunpack.c.l.b16 %v124
    %v349 = vunpack.c.l.b16 %v125
    %v350 = vunpack.c.l.b16 %v126
    %v351 = vunpack.c.l.b16 %v127
    %v352 = vunpack.c.l.b16 %v128
    %v353 = vunpack.c.l.b16 %v129
    %v354 = vunpack.c.l.b16 %v130
    %v355 = vpack.c.b16 %v340, %v339
    %v356 = vpack.c.b16 %v342, %v341
    %v357 = vpack.c.b16 %v344, %v343
    %v358 = vpack.c.b16 %v346, %v345
    %v359 = vpack.c.b16 %v348, %v347
    %v360 = vpack.c.b16 %v350, %v349
    %v361 = vpack.c.b16 %v352, %v351
    %v362 = vpack.c.b16 %v354, %v353
    %371 = vmatprep.subr.bf16.mxu0 0
    %372 = vmatpush1.bf16.xpose.msra.mxu0 %v362
    %373 = vmatprep.subr.bf16.mxu0 0
    %374 = vmatpush1.bf16.xpose.msra.mxu0 %v361
    %375 = vmatprep.subr.bf16.mxu0 0
    %376 = vmatpush1.bf16.xpose.msra.mxu0 %v360
    %377 = vmatprep.subr.bf16.mxu0 0
    %378 = vmatpush1.bf16.xpose.msra.mxu0 %v359
    %379 = vmatprep.subr.bf16.mxu0 0
    %380 = vmatpush1.bf16.xpose.msra.mxu0 %v358
    %381 = vmatprep.subr.bf16.mxu0 0
    %382 = vmatpush1.bf16.xpose.msra.mxu0 %v357
    %383 = vmatprep.subr.bf16.mxu0 0
    %384 = vmatpush1.bf16.xpose.msra.mxu0 %v356
    %385 = vmatprep.subr.bf16.mxu0 0
    %386 = vmatpush1.bf16.xpose.msra.mxu0 %v355
    %387 = vmatprep.subr.bf16.mxu0 0
    %388 = vmatpush2.bf16.xpose.msra.mxu0 0
    %389 = vmatprep.subr.bf16.mxu0 0
    %390 = vmatpush2.bf16.xpose.msra.mxu0 0
    %391 = vmatprep.subr.bf16.mxu0 0
    %392 = vmatpush2.bf16.xpose.msra.mxu0 0
    %393 = vmatprep.subr.bf16.mxu0 0
    %394 = vmatpush2.bf16.xpose.msra.mxu0 0
    %395 = vmatprep.subr.bf16.mxu0 0
    %396 = vmatpush2.bf16.xpose.msra.mxu0 0
    %397 = vmatprep.subr.bf16.mxu0 0
    %398 = vmatpush2.bf16.xpose.msra.mxu0 0
    %399 = vmatprep.subr.bf16.mxu0 0
    %400 = vmatpush2.bf16.xpose.msra.mxu0 0
    %401 = vmatprep.subr.bf16.mxu0 0
    %402 = vmatpush2.bf16.xpose.msra.mxu0 0
    %403 = vmatprep.mubr.bf16.mxu0 0
    %404 = vmatmul.mubr.bf16.gmra.mxu0 %v259
    %v405 = vpop.f32.mrf.mxu0
    %v406 = vadd.f32 0.0, %v405
    %v407 = vpop.f32.mrf.mxu0
    %v408 = vpop.f32.mrf.mxu0
    %v409 = vadd.f32 0.0, %v408
    %v410 = vpop.f32.mrf.mxu0
    %411 = vmatprep.mubr.bf16.mxu0 0
    %412 = vmatmul.mubr.bf16.gmra.mxu0 %v260
    %v413 = vpop.f32.mrf.mxu0
    %v414 = vadd.f32 0.0, %v413
    %v415 = vpop.f32.mrf.mxu0
    %v416 = vpop.f32.mrf.mxu0
    %v417 = vadd.f32 0.0, %v416
    %v418 = vpop.f32.mrf.mxu0
    %419 = vmatprep.mubr.bf16.mxu0 0
    %420 = vmatmul.mubr.bf16.gmra.mxu0 %v261
    %v421 = vpop.f32.mrf.mxu0
    %v422 = vadd.f32 0.0, %v421
    %v423 = vpop.f32.mrf.mxu0
    %v424 = vpop.f32.mrf.mxu0
    %v425 = vadd.f32 0.0, %v424
    %v426 = vpop.f32.mrf.mxu0
    %427 = vmatprep.mubr.bf16.mxu0 0
    %428 = vmatmul.mubr.bf16.gmra.mxu0 %v262
    %v429 = vpop.f32.mrf.mxu0
    %v430 = vadd.f32 0.0, %v429
    %v431 = vpop.f32.mrf.mxu0
    %v432 = vpop.f32.mrf.mxu0
    %v433 = vadd.f32 0.0, %v432
    %v434 = vpop.f32.mrf.mxu0
    %435 = vmatprep.mubr.bf16.mxu0 0
    %436 = vmatmul.mubr.bf16.gmra.mxu0 %v263
    %v437 = vpop.f32.mrf.mxu0
    %v438 = vadd.f32 0.0, %v437
    %v439 = vpop.f32.mrf.mxu0
    %v440 = vpop.f32.mrf.mxu0
    %v441 = vadd.f32 0.0, %v440
    %v442 = vpop.f32.mrf.mxu0
    %443 = vmatprep.mubr.bf16.mxu0 0
    %444 = vmatmul.mubr.bf16.gmra.mxu0 %v264
    %v445 = vpop.f32.mrf.mxu0
    %v446 = vadd.f32 0.0, %v445
    %v447 = vpop.f32.mrf.mxu0
    %v448 = vpop.f32.mrf.mxu0
    %v449 = vadd.f32 0.0, %v448
    %v450 = vpop.f32.mrf.mxu0
    %451 = vmatprep.mubr.bf16.mxu0 0
    %452 = vmatmul.mubr.bf16.gmra.mxu0 %v265
    %v453 = vpop.f32.mrf.mxu0
    %v454 = vadd.f32 0.0, %v453
    %v455 = vpop.f32.mrf.mxu0
    %v456 = vpop.f32.mrf.mxu0
    %v457 = vadd.f32 0.0, %v456
    %v458 = vpop.f32.mrf.mxu0
    %459 = vmatprep.mubr.bf16.mxu0 0
    %460 = vmatmul.mubr.bf16.gmra.mxu0 %v266
    %v461 = vpop.f32.mrf.mxu0
    %v462 = vadd.f32 0.0, %v461
    %v463 = vpop.f32.mrf.mxu0
    %v464 = vpop.f32.mrf.mxu0
    %v465 = vadd.f32 0.0, %v464
    %v466 = vpop.f32.mrf.mxu0
    %467 = vmatprep.mubr.bf16.mxu0 0
    %468 = vmatmul.mubr.bf16.gmra.mxu0 %v267
    %v469 = vpop.f32.mrf.mxu0
    %v470 = vadd.f32 0.0, %v469
    %v471 = vpop.f32.mrf.mxu0
    %v472 = vpop.f32.mrf.mxu0
    %v473 = vadd.f32 0.0, %v472
    %v474 = vpop.f32.mrf.mxu0
    %475 = vmatprep.mubr.bf16.mxu0 0
    %476 = vmatmul.mubr.bf16.gmra.mxu0 %v268
    %v477 = vpop.f32.mrf.mxu0
    %v478 = vadd.f32 0.0, %v477
    %v479 = vpop.f32.mrf.mxu0
    %v480 = vpop.f32.mrf.mxu0
    %v481 = vadd.f32 0.0, %v480
    %v482 = vpop.f32.mrf.mxu0
    %483 = vmatprep.mubr.bf16.mxu0 0
    %484 = vmatmul.mubr.bf16.gmra.mxu0 %v269
    %v485 = vpop.f32.mrf.mxu0
    %v486 = vadd.f32 0.0, %v485
    %v487 = vpop.f32.mrf.mxu0
    %v488 = vpop.f32.mrf.mxu0
    %v489 = vadd.f32 0.0, %v488
    %v490 = vpop.f32.mrf.mxu0
    %491 = vmatprep.mubr.bf16.mxu0 0
    %492 = vmatmul.mubr.bf16.gmra.mxu0 %v270
    %v493 = vpop.f32.mrf.mxu0
    %v494 = vadd.f32 0.0, %v493
    %v495 = vpop.f32.mrf.mxu0
    %v496 = vpop.f32.mrf.mxu0
    %v497 = vadd.f32 0.0, %v496
    %v498 = vpop.f32.mrf.mxu0
    %499 = vmatprep.mubr.bf16.mxu0 0
    %500 = vmatmul.mubr.bf16.gmra.mxu0 %v271
    %v501 = vpop.f32.mrf.mxu0
    %v502 = vadd.f32 0.0, %v501
    %v503 = vpop.f32.mrf.mxu0
    %v504 = vpop.f32.mrf.mxu0
    %v505 = vadd.f32 0.0, %v504
    %v506 = vpop.f32.mrf.mxu0
    %507 = vmatprep.mubr.bf16.mxu0 0
    %508 = vmatmul.mubr.bf16.gmra.mxu0 %v272
    %v509 = vpop.f32.mrf.mxu0
    %v510 = vadd.f32 0.0, %v509
    %v511 = vpop.f32.mrf.mxu0
    %v512 = vpop.f32.mrf.mxu0
    %v513 = vadd.f32 0.0, %v512
    %v514 = vpop.f32.mrf.mxu0
    %515 = vmatprep.mubr.bf16.mxu0 0
    %516 = vmatmul.mubr.bf16.gmra.mxu0 %v273
    %v517 = vpop.f32.mrf.mxu0
    %v518 = vadd.f32 0.0, %v517
    %v519 = vpop.f32.mrf.mxu0
    %v520 = vpop.f32.mrf.mxu0
    %v521 = vadd.f32 0.0, %v520
    %v522 = vpop.f32.mrf.mxu0
    %523 = vmatprep.mubr.bf16.mxu0 0
    %524 = vmatmul.mubr.bf16.gmra.mxu0 %v274
    %v525 = vpop.f32.mrf.mxu0
    %v526 = vadd.f32 0.0, %v525
    %v527 = vpop.f32.mrf.mxu0
    %v528 = vpop.f32.mrf.mxu0
    %v529 = vadd.f32 0.0, %v528
    %v530 = vpop.f32.mrf.mxu0
    %531 = vmatprep.mubr.bf16.mxu0 0
    %532 = vmatmul.mubr.bf16.gmra.mxu0 %v275
    %v533 = vpop.f32.mrf.mxu0
    %v534 = vadd.f32 0.0, %v533
    %v535 = vpop.f32.mrf.mxu0
    %v536 = vpop.f32.mrf.mxu0
    %v537 = vadd.f32 0.0, %v536
    %v538 = vpop.f32.mrf.mxu0
    %539 = vmatprep.mubr.bf16.mxu0 0
    %540 = vmatmul.mubr.bf16.gmra.mxu0 %v276
    %v541 = vpop.f32.mrf.mxu0
    %v542 = vadd.f32 0.0, %v541
    %v543 = vpop.f32.mrf.mxu0
    %v544 = vpop.f32.mrf.mxu0
    %v545 = vadd.f32 0.0, %v544
    %v546 = vpop.f32.mrf.mxu0
    %547 = vmatprep.mubr.bf16.mxu0 0
    %548 = vmatmul.mubr.bf16.gmra.mxu0 %v277
    %v549 = vpop.f32.mrf.mxu0
    %v550 = vadd.f32 0.0, %v549
    %v551 = vpop.f32.mrf.mxu0
    %v552 = vpop.f32.mrf.mxu0
    %v553 = vadd.f32 0.0, %v552
    %v554 = vpop.f32.mrf.mxu0
    %555 = vmatprep.mubr.bf16.mxu0 0
    %556 = vmatmul.mubr.bf16.gmra.mxu0 %v278
    %v557 = vpop.f32.mrf.mxu0
    %v558 = vadd.f32 0.0, %v557
    %v559 = vpop.f32.mrf.mxu0
    %v560 = vpop.f32.mrf.mxu0
    %v561 = vadd.f32 0.0, %v560
    %v562 = vpop.f32.mrf.mxu0
    %563 = vmatprep.mubr.bf16.mxu0 0
    %564 = vmatmul.mubr.bf16.gmra.mxu0 %v279
    %v565 = vpop.f32.mrf.mxu0
    %v566 = vadd.f32 0.0, %v565
    %v567 = vpop.f32.mrf.mxu0
    %v568 = vpop.f32.mrf.mxu0
    %v569 = vadd.f32 0.0, %v568
    %v570 = vpop.f32.mrf.mxu0
    %571 = vmatprep.mubr.bf16.mxu0 0
    %572 = vmatmul.mubr.bf16.gmra.mxu0 %v280
    %v573 = vpop.f32.mrf.mxu0
    %v574 = vadd.f32 0.0, %v573
    %v575 = vpop.f32.mrf.mxu0
    %v576 = vpop.f32.mrf.mxu0
    %v577 = vadd.f32 0.0, %v576
    %v578 = vpop.f32.mrf.mxu0
    %579 = vmatprep.mubr.bf16.mxu0 0
    %580 = vmatmul.mubr.bf16.gmra.mxu0 %v281
    %v581 = vpop.f32.mrf.mxu0
    %v582 = vadd.f32 0.0, %v581
    %v583 = vpop.f32.mrf.mxu0
    %v584 = vpop.f32.mrf.mxu0
    %v585 = vadd.f32 0.0, %v584
    %v586 = vpop.f32.mrf.mxu0
    %587 = vmatprep.mubr.bf16.mxu0 0
    %588 = vmatmul.mubr.bf16.gmra.mxu0 %v282
    %v589 = vpop.f32.mrf.mxu0
    %v590 = vadd.f32 0.0, %v589
    %v591 = vpop.f32.mrf.mxu0
    %v592 = vpop.f32.mrf.mxu0
    %v593 = vadd.f32 0.0, %v592
    %v594 = vpop.f32.mrf.mxu0
    %595 = vmatprep.mubr.bf16.mxu0 0
    %596 = vmatmul.mubr.bf16.gmra.mxu0 %v283
    %v597 = vpop.f32.mrf.mxu0
    %v598 = vadd.f32 0.0, %v597
    %v599 = vpop.f32.mrf.mxu0
    %v600 = vpop.f32.mrf.mxu0
    %v601 = vadd.f32 0.0, %v600
    %v602 = vpop.f32.mrf.mxu0
    %603 = vmatprep.mubr.bf16.mxu0 0
    %604 = vmatmul.mubr.bf16.gmra.mxu0 %v284
    %v605 = vpop.f32.mrf.mxu0
    %v606 = vadd.f32 0.0, %v605
    %v607 = vpop.f32.mrf.mxu0
    %v608 = vpop.f32.mrf.mxu0
    %v609 = vadd.f32 0.0, %v608
    %v610 = vpop.f32.mrf.mxu0
    %611 = vmatprep.mubr.bf16.mxu0 0
    %612 = vmatmul.mubr.bf16.gmra.mxu0 %v285
    %v613 = vpop.f32.mrf.mxu0
    %v614 = vadd.f32 0.0, %v613
    %v615 = vpop.f32.mrf.mxu0
    %v616 = vpop.f32.mrf.mxu0
    %v617 = vadd.f32 0.0, %v616
    %v618 = vpop.f32.mrf.mxu0
    %619 = vmatprep.mubr.bf16.mxu0 0
    %620 = vmatmul.mubr.bf16.gmra.mxu0 %v286
    %v621 = vpop.f32.mrf.mxu0
    %v622 = vadd.f32 0.0, %v621
    %v623 = vpop.f32.mrf.mxu0
    %v624 = vpop.f32.mrf.mxu0
    %v625 = vadd.f32 0.0, %v624
    %v626 = vpop.f32.mrf.mxu0
    %627 = vmatprep.mubr.bf16.mxu0 0
    %628 = vmatmul.mubr.bf16.gmra.mxu0 %v287
    %v629 = vpop.f32.mrf.mxu0
    %v630 = vadd.f32 0.0, %v629
    %v631 = vpop.f32.mrf.mxu0
    %v632 = vpop.f32.mrf.mxu0
    %v633 = vadd.f32 0.0, %v632
    %v634 = vpop.f32.mrf.mxu0
    %635 = vmatprep.mubr.bf16.mxu0 0
    %636 = vmatmul.mubr.bf16.gmra.mxu0 %v288
    %v637 = vpop.f32.mrf.mxu0
    %v638 = vadd.f32 0.0, %v637
    %v639 = vpop.f32.mrf.mxu0
    %v640 = vpop.f32.mrf.mxu0
    %v641 = vadd.f32 0.0, %v640
    %v642 = vpop.f32.mrf.mxu0
    %643 = vmatprep.mubr.bf16.mxu0 0
    %644 = vmatmul.mubr.bf16.gmra.mxu0 %v289
    %v645 = vpop.f32.mrf.mxu0
    %v646 = vadd.f32 0.0, %v645
    %v647 = vpop.f32.mrf.mxu0
    %v648 = vpop.f32.mrf.mxu0
    %v649 = vadd.f32 0.0, %v648
    %v650 = vpop.f32.mrf.mxu0
    %651 = vmatprep.mubr.bf16.mxu0 0
    %652 = vmatmul.mubr.bf16.gmra.mxu0 %v290
    %v653 = vpop.f32.mrf.mxu0
    %v654 = vadd.f32 0.0, %v653
    %v655 = vpop.f32.mrf.mxu0
    %v656 = vpop.f32.mrf.mxu0
    %v657 = vadd.f32 0.0, %v656
    %v658 = vpop.f32.mrf.mxu0
    %659 = vdwg.mxu0
    %s660 = smul.u32 0, 512
    %v661 = vlaneseq
    %v662 = vshrl.u32 %v661, 7
    %v663 = vadd.s32 %v662, 8
    %v664 = vadd.s32 %v662, 16
    %v665 = vadd.s32 %v662, 24
    %v666 = vadd.s32 %v662, 32
    %v667 = vadd.s32 %v662, 40
    %v668 = vadd.s32 %v662, 48
    %v669 = vadd.s32 %v662, 56
    %v670 = vadd.s32 %v662, 64
    %v671 = vadd.s32 %v662, 72
    %v672 = vadd.s32 %v662, 80
    %v673 = vadd.s32 %v662, 88
    %v674 = vadd.s32 %v662, 96
    %v675 = vadd.s32 %v662, 104
    %v676 = vadd.s32 %v662, 112
    %v677 = vadd.s32 %v662, 120
    %v678 = vadd.s32 %v662, 128
    %v679 = vadd.s32 %v662, 136
    %v680 = vadd.s32 %v662, 144
    %v681 = vadd.s32 %v662, 152
    %v682 = vadd.s32 %v662, 160
    %v683 = vadd.s32 %v662, 168
    %v684 = vadd.s32 %v662, 176
    %v685 = vadd.s32 %v662, 184
    %v686 = vadd.s32 %v662, 192
    %v687 = vadd.s32 %v662, 200
    %v688 = vadd.s32 %v662, 208
    %v689 = vadd.s32 %v662, 216
    %v690 = vadd.s32 %v662, 224
    %v691 = vadd.s32 %v662, 232
    %v692 = vadd.s32 %v662, 240
    %v693 = vadd.s32 %v662, 248
    %v694 = vadd.s32 %v662, 256
    %v695 = vadd.s32 %v662, 264
    %v696 = vadd.s32 %v662, 272
    %v697 = vadd.s32 %v662, 280
    %v698 = vadd.s32 %v662, 288
    %v699 = vadd.s32 %v662, 296
    %v700 = vadd.s32 %v662, 304
    %v701 = vadd.s32 %v662, 312
    %v702 = vadd.s32 %v662, 320
    %v703 = vadd.s32 %v662, 328
    %v704 = vadd.s32 %v662, 336
    %v705 = vadd.s32 %v662, 344
    %v706 = vadd.s32 %v662, 352
    %v707 = vadd.s32 %v662, 360
    %v708 = vadd.s32 %v662, 368
    %v709 = vadd.s32 %v662, 376
    %v710 = vadd.s32 %v662, 384
    %v711 = vadd.s32 %v662, 392
    %v712 = vadd.s32 %v662, 400
    %v713 = vadd.s32 %v662, 408
    %v714 = vadd.s32 %v662, 416
    %v715 = vadd.s32 %v662, 424
    %v716 = vadd.s32 %v662, 432
    %v717 = vadd.s32 %v662, 440
    %v718 = vadd.s32 %v662, 448
    %v719 = vadd.s32 %v662, 456
    %v720 = vadd.s32 %v662, 464
    %v721 = vadd.s32 %v662, 472
    %v722 = vadd.s32 %v662, 480
    %v723 = vadd.s32 %v662, 488
    %v724 = vadd.s32 %v662, 496
    %v725 = vadd.s32 %v662, 504
    %v726 = vstv %s660
    %v727 = vadd.s32 %v726, %v662
    %v728 = vadd.s32 %v726, %v663
    %v729 = vadd.s32 %v726, %v664
    %v730 = vadd.s32 %v726, %v665
    %v731 = vadd.s32 %v726, %v666
    %v732 = vadd.s32 %v726, %v667
    %v733 = vadd.s32 %v726, %v668
    %v734 = vadd.s32 %v726, %v669
    %v735 = vadd.s32 %v726, %v670
    %v736 = vadd.s32 %v726, %v671
    %v737 = vadd.s32 %v726, %v672
    %v738 = vadd.s32 %v726, %v673
    %v739 = vadd.s32 %v726, %v674
    %v740 = vadd.s32 %v726, %v675
    %v741 = vadd.s32 %v726, %v676
    %v742 = vadd.s32 %v726, %v677
    %v743 = vadd.s32 %v726, %v678
    %v744 = vadd.s32 %v726, %v679
    %v745 = vadd.s32 %v726, %v680
    %v746 = vadd.s32 %v726, %v681
    %v747 = vadd.s32 %v726, %v682
    %v748 = vadd.s32 %v726, %v683
    %v749 = vadd.s32 %v726, %v684
    %v750 = vadd.s32 %v726, %v685
    %v751 = vadd.s32 %v726, %v686
    %v752 = vadd.s32 %v726, %v687
    %v753 = vadd.s32 %v726, %v688
    %v754 = vadd.s32 %v726, %v689
    %v755 = vadd.s32 %v726, %v690
    %v756 = vadd.s32 %v726, %v691
    %v757 = vadd.s32 %v726, %v692
    %v758 = vadd.s32 %v726, %v693
    %v759 = vadd.s32 %v726, %v694
    %v760 = vadd.s32 %v726, %v695
    %v761 = vadd.s32 %v726, %v696
    %v762 = vadd.s32 %v726, %v697
    %v763 = vadd.s32 %v726, %v698
    %v764 = vadd.s32 %v726, %v699
    %v765 = vadd.s32 %v726, %v700
    %v766 = vadd.s32 %v726, %v701
    %v767 = vadd.s32 %v726, %v702
    %v768 = vadd.s32 %v726, %v703
    %v769 = vadd.s32 %v726, %v704
    %v770 = vadd.s32 %v726, %v705
    %v771 = vadd.s32 %v726, %v706
    %v772 = vadd.s32 %v726, %v707
    %v773 = vadd.s32 %v726, %v708
    %v774 = vadd.s32 %v726, %v709
    %v775 = vadd.s32 %v726, %v710
    %v776 = vadd.s32 %v726, %v711
    %v777 = vadd.s32 %v726, %v712
    %v778 = vadd.s32 %v726, %v713
    %v779 = vadd.s32 %v726, %v714
    %v780 = vadd.s32 %v726, %v715
    %v781 = vadd.s32 %v726, %v716
    %v782 = vadd.s32 %v726, %v717
    %v783 = vadd.s32 %v726, %v718
    %v784 = vadd.s32 %v726, %v719
    %v785 = vadd.s32 %v726, %v720
    %v786 = vadd.s32 %v726, %v721
    %v787 = vadd.s32 %v726, %v722
    %v788 = vadd.s32 %v726, %v723
    %v789 = vadd.s32 %v726, %v724
    %v790 = vadd.s32 %v726, %v725
    %v791 = vld [vmem:[%s2] sm:$0x1]
    %v792 = vld [vmem:[#allocation4] sm:$0x1]
    %v793 = vlaneseq
    %v794 = vshrl.u32 %v793, 7
    %v795 = vsub.s32 0, %v794
    %v796 = vrot.slane %v791, %v795
    %vm797 = vcmp.eq.s32.totalorder %v727, %v796
    %vm798 = vcmp.eq.s32.totalorder %v728, %v796
    %vm799 = vcmp.eq.s32.totalorder %v729, %v796
    %vm800 = vcmp.eq.s32.totalorder %v730, %v796
    %vm801 = vcmp.eq.s32.totalorder %v731, %v796
    %vm802 = vcmp.eq.s32.totalorder %v732, %v796
    %vm803 = vcmp.eq.s32.totalorder %v733, %v796
    %vm804 = vcmp.eq.s32.totalorder %v734, %v796
    %vm805 = vcmp.eq.s32.totalorder %v735, %v796
    %vm806 = vcmp.eq.s32.totalorder %v736, %v796
    %vm807 = vcmp.eq.s32.totalorder %v737, %v796
    %vm808 = vcmp.eq.s32.totalorder %v738, %v796
    %vm809 = vcmp.eq.s32.totalorder %v739, %v796
    %vm810 = vcmp.eq.s32.totalorder %v740, %v796
    %vm811 = vcmp.eq.s32.totalorder %v741, %v796
    %vm812 = vcmp.eq.s32.totalorder %v742, %v796
    %vm813 = vcmp.eq.s32.totalorder %v743, %v796
    %vm814 = vcmp.eq.s32.totalorder %v744, %v796
    %vm815 = vcmp.eq.s32.totalorder %v745, %v796
    %vm816 = vcmp.eq.s32.totalorder %v746, %v796
    %vm817 = vcmp.eq.s32.totalorder %v747, %v796
    %vm818 = vcmp.eq.s32.totalorder %v748, %v796
    %vm819 = vcmp.eq.s32.totalorder %v749, %v796
    %vm820 = vcmp.eq.s32.totalorder %v750, %v796
    %vm821 = vcmp.eq.s32.totalorder %v751, %v796
    %vm822 = vcmp.eq.s32.totalorder %v752, %v796
    %vm823 = vcmp.eq.s32.totalorder %v753, %v796
    %vm824 = vcmp.eq.s32.totalorder %v754, %v796
    %vm825 = vcmp.eq.s32.totalorder %v755, %v796
    %vm826 = vcmp.eq.s32.totalorder %v756, %v796
    %vm827 = vcmp.eq.s32.totalorder %v757, %v796
    %vm828 = vcmp.eq.s32.totalorder %v758, %v796
    %vm829 = vcmp.eq.s32.totalorder %v759, %v796
    %vm830 = vcmp.eq.s32.totalorder %v760, %v796
    %vm831 = vcmp.eq.s32.totalorder %v761, %v796
    %vm832 = vcmp.eq.s32.totalorder %v762, %v796
    %vm833 = vcmp.eq.s32.totalorder %v763, %v796
    %vm834 = vcmp.eq.s32.totalorder %v764, %v796
    %vm835 = vcmp.eq.s32.totalorder %v765, %v796
    %vm836 = vcmp.eq.s32.totalorder %v766, %v796
    %vm837 = vcmp.eq.s32.totalorder %v767, %v796
    %vm838 = vcmp.eq.s32.totalorder %v768, %v796
    %vm839 = vcmp.eq.s32.totalorder %v769, %v796
    %vm840 = vcmp.eq.s32.totalorder %v770, %v796
    %vm841 = vcmp.eq.s32.totalorder %v771, %v796
    %vm842 = vcmp.eq.s32.totalorder %v772, %v796
    %vm843 = vcmp.eq.s32.totalorder %v773, %v796
    %vm844 = vcmp.eq.s32.totalorder %v774, %v796
    %vm845 = vcmp.eq.s32.totalorder %v775, %v796
    %vm846 = vcmp.eq.s32.totalorder %v776, %v796
    %vm847 = vcmp.eq.s32.totalorder %v777, %v796
    %vm848 = vcmp.eq.s32.totalorder %v778, %v796
    %vm849 = vcmp.eq.s32.totalorder %v779, %v796
    %vm850 = vcmp.eq.s32.totalorder %v780, %v796
    %vm851 = vcmp.eq.s32.totalorder %v781, %v796
    %vm852 = vcmp.eq.s32.totalorder %v782, %v796
    %vm853 = vcmp.eq.s32.totalorder %v783, %v796
    %vm854 = vcmp.eq.s32.totalorder %v784, %v796
    %vm855 = vcmp.eq.s32.totalorder %v785, %v796
    %vm856 = vcmp.eq.s32.totalorder %v786, %v796
    %vm857 = vcmp.eq.s32.totalorder %v787, %v796
    %vm858 = vcmp.eq.s32.totalorder %v788, %v796
    %vm859 = vcmp.eq.s32.totalorder %v789, %v796
    %vm860 = vcmp.eq.s32.totalorder %v790, %v796
    %v861 = vsel %vm797, %v406, 0.0
    %v862 = vsel %vm798, %v409, 0.0
    %v863 = vsel %vm799, %v414, 0.0
    %v864 = vsel %vm800, %v417, 0.0
    %v865 = vsel %vm801, %v422, 0.0
    %v866 = vsel %vm802, %v425, 0.0
    %v867 = vsel %vm803, %v430, 0.0
    %v868 = vsel %vm804, %v433, 0.0
    %v869 = vsel %vm805, %v438, 0.0
    %v870 = vsel %vm806, %v441, 0.0
    %v871 = vsel %vm807, %v446, 0.0
    %v872 = vsel %vm808, %v449, 0.0
    %v873 = vsel %vm809, %v454, 0.0
    %v874 = vsel %vm810, %v457, 0.0
    %v875 = vsel %vm811, %v462, 0.0
    %v876 = vsel %vm812, %v465, 0.0
    %v877 = vsel %vm813, %v470, 0.0
    %v878 = vsel %vm814, %v473, 0.0
    %v879 = vsel %vm815, %v478, 0.0
    %v880 = vsel %vm816, %v481, 0.0
    %v881 = vsel %vm817, %v486, 0.0
    %v882 = vsel %vm818, %v489, 0.0
    %v883 = vsel %vm819, %v494, 0.0
    %v884 = vsel %vm820, %v497, 0.0
    %v885 = vsel %vm821, %v502, 0.0
    %v886 = vsel %vm822, %v505, 0.0
    %v887 = vsel %vm823, %v510, 0.0
    %v888 = vsel %vm824, %v513, 0.0
    %v889 = vsel %vm825, %v518, 0.0
    %v890 = vsel %vm826, %v521, 0.0
    %v891 = vsel %vm827, %v526, 0.0
    %v892 = vsel %vm828, %v529, 0.0
    %v893 = vsel %vm829, %v534, 0.0
    %v894 = vsel %vm830, %v537, 0.0
    %v895 = vsel %vm831, %v542, 0.0
    %v896 = vsel %vm832, %v545, 0.0
    %v897 = vsel %vm833, %v550, 0.0
    %v898 = vsel %vm834, %v553, 0.0
    %v899 = vsel %vm835, %v558, 0.0
    %v900 = vsel %vm836, %v561, 0.0
    %v901 = vsel %vm837, %v566, 0.0
    %v902 = vsel %vm838, %v569, 0.0
    %v903 = vsel %vm839, %v574, 0.0
    %v904 = vsel %vm840, %v577, 0.0
    %v905 = vsel %vm841, %v582, 0.0
    %v906 = vsel %vm842, %v585, 0.0
    %v907 = vsel %vm843, %v590, 0.0
    %v908 = vsel %vm844, %v593, 0.0
    %v909 = vsel %vm845, %v598, 0.0
    %v910 = vsel %vm846, %v601, 0.0
    %v911 = vsel %vm847, %v606, 0.0
    %v912 = vsel %vm848, %v609, 0.0
    %v913 = vsel %vm849, %v614, 0.0
    %v914 = vsel %vm850, %v617, 0.0
    %v915 = vsel %vm851, %v622, 0.0
    %v916 = vsel %vm852, %v625, 0.0
    %v917 = vsel %vm853, %v630, 0.0
    %v918 = vsel %vm854, %v633, 0.0
    %v919 = vsel %vm855, %v638, 0.0
    %v920 = vsel %vm856, %v641, 0.0
    %v921 = vsel %vm857, %v646, 0.0
    %v922 = vsel %vm858, %v649, 0.0
    %v923 = vsel %vm859, %v654, 0.0
    %v924 = vsel %vm860, %v657, 0.0
    %v925 = vadd.f32 %v861, %v862
    %v926 = vadd.f32 %v925, %v863
    %v927 = vadd.f32 %v926, %v864
    %v928 = vadd.f32 %v927, %v865
    %v929 = vadd.f32 %v928, %v866
    %v930 = vadd.f32 %v929, %v867
    %v931 = vadd.f32 %v930, %v868
    %v932 = vadd.f32 %v931, %v869
    %v933 = vadd.f32 %v932, %v870
    %v934 = vadd.f32 %v933, %v871
    %v935 = vadd.f32 %v934, %v872
    %v936 = vadd.f32 %v935, %v873
    %v937 = vadd.f32 %v936, %v874
    %v938 = vadd.f32 %v937, %v875
    %v939 = vadd.f32 %v938, %v876
    %v940 = vadd.f32 %v939, %v877
    %v941 = vadd.f32 %v940, %v878
    %v942 = vadd.f32 %v941, %v879
    %v943 = vadd.f32 %v942, %v880
    %v944 = vadd.f32 %v943, %v881
    %v945 = vadd.f32 %v944, %v882
    %v946 = vadd.f32 %v945, %v883
    %v947 = vadd.f32 %v946, %v884
    %v948 = vadd.f32 %v947, %v885
    %v949 = vadd.f32 %v948, %v886
    %v950 = vadd.f32 %v949, %v887
    %v951 = vadd.f32 %v950, %v888
    %v952 = vadd.f32 %v951, %v889
    %v953 = vadd.f32 %v952, %v890
    %v954 = vadd.f32 %v953, %v891
    %v955 = vadd.f32 %v954, %v892
    %v956 = vadd.f32 %v955, %v893
    %v957 = vadd.f32 %v956, %v894
    %v958 = vadd.f32 %v957, %v895
    %v959 = vadd.f32 %v958, %v896
    %v960 = vadd.f32 %v959, %v897
    %v961 = vadd.f32 %v960, %v898
    %v962 = vadd.f32 %v961, %v899
    %v963 = vadd.f32 %v962, %v900
    %v964 = vadd.f32 %v963, %v901
    %v965 = vadd.f32 %v964, %v902
    %v966 = vadd.f32 %v965, %v903
    %v967 = vadd.f32 %v966, %v904
    %v968 = vadd.f32 %v967, %v905
    %v969 = vadd.f32 %v968, %v906
    %v970 = vadd.f32 %v969, %v907
    %v971 = vadd.f32 %v970, %v908
    %v972 = vadd.f32 %v971, %v909
    %v973 = vadd.f32 %v972, %v910
    %v974 = vadd.f32 %v973, %v911
    %v975 = vadd.f32 %v974, %v912
    %v976 = vadd.f32 %v975, %v913
    %v977 = vadd.f32 %v976, %v914
    %v978 = vadd.f32 %v977, %v915
    %v979 = vadd.f32 %v978, %v916
    %v980 = vadd.f32 %v979, %v917
    %v981 = vadd.f32 %v980, %v918
    %v982 = vadd.f32 %v981, %v919
    %v983 = vadd.f32 %v982, %v920
    %v984 = vadd.f32 %v983, %v921
    %v985 = vadd.f32 %v984, %v922
    %v986 = vadd.f32 %v985, %v923
    %v987 = vadd.f32 %v986, %v924
    %v988 = vrot.slane %v987, 4
    %v989 = vadd.f32 %v987, %v988
    %v990 = vrot.slane %v989, 2
    %v991 = vadd.f32 %v989, %v990
    %v992 = vrot.slane %v991, 1
    %v993 = vadd.f32 %v991, %v992
    %v994 = vadd.f32 %v792, %v993
    %995 = vst [vmem:[#allocation4] sm:$0x1] %v994
    %v996 = vld [vmem:[#allocation2] sm:$0x1]
    %v997 = vmax.f32 %v406, %v422
    %v998 = vmax.f32 %v409, %v425
    %v999 = vmax.f32 %v414, %v430
    %v1000 = vmax.f32 %v417, %v433
    %v1001 = vmax.f32 %v997, %v438
    %v1002 = vmax.f32 %v998, %v441
    %v1003 = vmax.f32 %v999, %v446
    %v1004 = vmax.f32 %v1000, %v449
    %v1005 = vmax.f32 %v1001, %v454
    %v1006 = vmax.f32 %v1002, %v457
    %v1007 = vmax.f32 %v1003, %v462
    %v1008 = vmax.f32 %v1004, %v465
    %v1009 = vmax.f32 %v1005, %v470
    %v1010 = vmax.f32 %v1006, %v473
    %v1011 = vmax.f32 %v1007, %v478
    %v1012 = vmax.f32 %v1008, %v481
    %v1013 = vmax.f32 %v1009, %v486
    %v1014 = vmax.f32 %v1010, %v489
    %v1015 = vmax.f32 %v1011, %v494
    %v1016 = vmax.f32 %v1012, %v497
    %v1017 = vmax.f32 %v1013, %v502
    %v1018 = vmax.f32 %v1014, %v505
    %v1019 = vmax.f32 %v1015, %v510
    %v1020 = vmax.f32 %v1016, %v513
    %v1021 = vmax.f32 %v1017, %v518
    %v1022 = vmax.f32 %v1018, %v521
    %v1023 = vmax.f32 %v1019, %v526
    %v1024 = vmax.f32 %v1020, %v529
    %v1025 = vmax.f32 %v1021, %v534
    %v1026 = vmax.f32 %v1022, %v537
    %v1027 = vmax.f32 %v1023, %v542
    %v1028 = vmax.f32 %v1024, %v545
    %v1029 = vmax.f32 %v1025, %v550
    %v1030 = vmax.f32 %v1026, %v553
    %v1031 = vmax.f32 %v1027, %v558
    %v1032 = vmax.f32 %v1028, %v561
    %v1033 = vmax.f32 %v1029, %v566
    %v1034 = vmax.f32 %v1030, %v569
    %v1035 = vmax.f32 %v1031, %v574
    %v1036 = vmax.f32 %v1032, %v577
    %v1037 = vmax.f32 %v1033, %v582
    %v1038 = vmax.f32 %v1034, %v585
    %v1039 = vmax.f32 %v1035, %v590
    %v1040 = vmax.f32 %v1036, %v593
    %v1041 = vmax.f32 %v1037, %v598
    %v1042 = vmax.f32 %v1038, %v601
    %v1043 = vmax.f32 %v1039, %v606
    %v1044 = vmax.f32 %v1040, %v609
    %v1045 = vmax.f32 %v1041, %v614
    %v1046 = vmax.f32 %v1042, %v617
    %v1047 = vmax.f32 %v1043, %v622
    %v1048 = vmax.f32 %v1044, %v625
    %v1049 = vmax.f32 %v1045, %v630
    %v1050 = vmax.f32 %v1046, %v633
    %v1051 = vmax.f32 %v1047, %v638
    %v1052 = vmax.f32 %v1048, %v641
    %v1053 = vmax.f32 %v1049, %v646
    %v1054 = vmax.f32 %v1050, %v649
    %v1055 = vmax.f32 %v1051, %v654
    %v1056 = vmax.f32 %v1052, %v657
    %v1057 = vmax.f32 %v1053, %v1054
    %v1058 = vmax.f32 %v1055, %v1056
    %v1059 = vmax.f32 %v1057, %v1058
    %v1060 = vrot.slane %v1059, 4
    %v1061 = vmax.f32 %v1059, %v1060
    %v1062 = vrot.slane %v1061, 2
    %v1063 = vmax.f32 %v1061, %v1062
    %v1064 = vrot.slane %v1063, 1
    %v1065 = vmax.f32 %v1063, %v1064
    %v1066 = vmax.f32 %v996, %v1065
    %v1067 = vld [vmem:[#allocation3] sm:$0x1]
    %v1068 = vsub.f32 %v996, %v1066
    %v1069 = vmul.f32 %v1068, 1.442695
    %v1070 = vpow.pop %v1069
    %v1071 = vmul.f32 %v1067, %v1070
    %v1073 = vlaneseq
    %v1074 = vshrl.u32 %v1073, 7
    %v1075 = vsub.s32 0, %v1074
    %v1076 = vrot.slane %v1066, %v1075
    %v1078 = vsub.f32 %v406, %v1076
    %v1079 = vsub.f32 %v409, %v1076
    %v1080 = vsub.f32 %v414, %v1076
    %v1081 = vsub.f32 %v417, %v1076
    %v1082 = vsub.f32 %v422, %v1076
    %v1083 = vsub.f32 %v425, %v1076
    %v1084 = vsub.f32 %v430, %v1076
    %v1085 = vsub.f32 %v433, %v1076
    %v1086 = vsub.f32 %v438, %v1076
    %v1087 = vsub.f32 %v441, %v1076
    %v1088 = vsub.f32 %v446, %v1076
    %v1089 = vsub.f32 %v449, %v1076
    %v1090 = vsub.f32 %v454, %v1076
    %v1091 = vsub.f32 %v457, %v1076
    %v1092 = vsub.f32 %v462, %v1076
    %v1093 = vsub.f32 %v465, %v1076
    %v1094 = vsub.f32 %v470, %v1076
    %v1095 = vsub.f32 %v473, %v1076
    %v1096 = vsub.f32 %v478, %v1076
    %v1097 = vsub.f32 %v481, %v1076
    %v1098 = vsub.f32 %v486, %v1076
    %v1099 = vsub.f32 %v489, %v1076
    %v1100 = vsub.f32 %v494, %v1076
    %v1101 = vsub.f32 %v497, %v1076
    %v1102 = vsub.f32 %v502, %v1076
    %v1103 = vsub.f32 %v505, %v1076
    %v1104 = vsub.f32 %v510, %v1076
    %v1105 = vsub.f32 %v513, %v1076
    %v1106 = vsub.f32 %v518, %v1076
    %v1107 = vsub.f32 %v521, %v1076
    %v1108 = vsub.f32 %v526, %v1076
    %v1109 = vsub.f32 %v529, %v1076
    %v1110 = vsub.f32 %v534, %v1076
    %v1111 = vsub.f32 %v537, %v1076
    %v1112 = vsub.f32 %v542, %v1076
    %v1113 = vsub.f32 %v545, %v1076
    %v1114 = vsub.f32 %v550, %v1076
    %v1115 = vsub.f32 %v553, %v1076
    %v1116 = vsub.f32 %v558, %v1076
    %v1117 = vsub.f32 %v561, %v1076
    %v1118 = vsub.f32 %v566, %v1076
    %v1119 = vsub.f32 %v569, %v1076
    %v1120 = vsub.f32 %v574, %v1076
    %v1121 = vsub.f32 %v577, %v1076
    %v1122 = vsub.f32 %v582, %v1076
    %v1123 = vsub.f32 %v585, %v1076
    %v1124 = vsub.f32 %v590, %v1076
    %v1125 = vsub.f32 %v593, %v1076
    %v1126 = vsub.f32 %v598, %v1076
    %v1127 = vsub.f32 %v601, %v1076
    %v1128 = vsub.f32 %v606, %v1076
    %v1129 = vsub.f32 %v609, %v1076
    %v1130 = vsub.f32 %v614, %v1076
    %v1131 = vsub.f32 %v617, %v1076
    %v1132 = vsub.f32 %v622, %v1076
    %v1133 = vsub.f32 %v625, %v1076
    %v1134 = vsub.f32 %v630, %v1076
    %v1135 = vsub.f32 %v633, %v1076
    %v1136 = vsub.f32 %v638, %v1076
    %v1137 = vsub.f32 %v641, %v1076
    %v1138 = vsub.f32 %v646, %v1076
    %v1139 = vsub.f32 %v649, %v1076
    %v1140 = vsub.f32 %v654, %v1076
    %v1141 = vsub.f32 %v657, %v1076
    %v1142 = vmul.f32 %v1078, 1.442695
    %v1143 = vpow.pop %v1142
    %v1144 = vmul.f32 %v1079, 1.442695
    %v1145 = vpow.pop %v1144
    %v1146 = vmul.f32 %v1080, 1.442695
    %v1147 = vpow.pop %v1146
    %v1148 = vmul.f32 %v1081, 1.442695
    %v1149 = vpow.pop %v1148
    %v1150 = vmul.f32 %v1082, 1.442695
    %v1151 = vpow.pop %v1150
    %v1152 = vmul.f32 %v1083, 1.442695
    %v1153 = vpow.pop %v1152
    %v1154 = vmul.f32 %v1084, 1.442695
    %v1155 = vpow.pop %v1154
    %v1156 = vmul.f32 %v1085, 1.442695
    %v1157 = vpow.pop %v1156
    %v1158 = vmul.f32 %v1086, 1.442695
    %v1159 = vpow.pop %v1158
    %v1160 = vmul.f32 %v1087, 1.442695
    %v1161 = vpow.pop %v1160
    %v1162 = vmul.f32 %v1088, 1.442695
    %v1163 = vpow.pop %v1162
    %v1164 = vmul.f32 %v1089, 1.442695
    %v1165 = vpow.pop %v1164
    %v1166 = vmul.f32 %v1090, 1.442695
    %v1167 = vpow.pop %v1166
    %v1168 = vmul.f32 %v1091, 1.442695
    %v1169 = vpow.pop %v1168
    %v1170 = vmul.f32 %v1092, 1.442695
    %v1171 = vpow.pop %v1170
    %v1172 = vmul.f32 %v1093, 1.442695
    %v1173 = vpow.pop %v1172
    %v1174 = vmul.f32 %v1094, 1.442695
    %v1175 = vpow.pop %v1174
    %v1176 = vmul.f32 %v1095, 1.442695
    %v1177 = vpow.pop %v1176
    %v1178 = vmul.f32 %v1096, 1.442695
    %v1179 = vpow.pop %v1178
    %v1180 = vmul.f32 %v1097, 1.442695
    %v1181 = vpow.pop %v1180
    %v1182 = vmul.f32 %v1098, 1.442695
    %v1183 = vpow.pop %v1182
    %v1184 = vmul.f32 %v1099, 1.442695
    %v1185 = vpow.pop %v1184
    %v1186 = vmul.f32 %v1100, 1.442695
    %v1187 = vpow.pop %v1186
    %v1188 = vmul.f32 %v1101, 1.442695
    %v1189 = vpow.pop %v1188
    %v1190 = vmul.f32 %v1102, 1.442695
    %v1191 = vpow.pop %v1190
    %v1192 = vmul.f32 %v1103, 1.442695
    %v1193 = vpow.pop %v1192
    %v1194 = vmul.f32 %v1104, 1.442695
    %v1195 = vpow.pop %v1194
    %v1196 = vmul.f32 %v1105, 1.442695
    %v1197 = vpow.pop %v1196
    %v1198 = vmul.f32 %v1106, 1.442695
    %v1199 = vpow.pop %v1198
    %v1200 = vmul.f32 %v1107, 1.442695
    %v1201 = vpow.pop %v1200
    %v1202 = vmul.f32 %v1108, 1.442695
    %v1203 = vpow.pop %v1202
    %v1204 = vmul.f32 %v1109, 1.442695
    %v1205 = vpow.pop %v1204
    %v1206 = vmul.f32 %v1110, 1.442695
    %v1207 = vpow.pop %v1206
    %v1208 = vmul.f32 %v1111, 1.442695
    %v1209 = vpow.pop %v1208
    %v1210 = vmul.f32 %v1112, 1.442695
    %v1211 = vpow.pop %v1210
    %v1212 = vmul.f32 %v1113, 1.442695
    %v1213 = vpow.pop %v1212
    %v1214 = vmul.f32 %v1114, 1.442695
    %v1215 = vpow.pop %v1214
    %v1216 = vmul.f32 %v1115, 1.442695
    %v1217 = vpow.pop %v1216
    %v1218 = vmul.f32 %v1116, 1.442695
    %v1219 = vpow.pop %v1218
    %v1220 = vmul.f32 %v1117, 1.442695
    %v1221 = vpow.pop %v1220
    %v1222 = vmul.f32 %v1118, 1.442695
    %v1223 = vpow.pop %v1222
    %v1224 = vmul.f32 %v1119, 1.442695
    %v1225 = vpow.pop %v1224
    %v1226 = vmul.f32 %v1120, 1.442695
    %v1227 = vpow.pop %v1226
    %v1228 = vmul.f32 %v1121, 1.442695
    %v1229 = vpow.pop %v1228
    %v1230 = vmul.f32 %v1122, 1.442695
    %v1231 = vpow.pop %v1230
    %v1232 = vmul.f32 %v1123, 1.442695
    %v1233 = vpow.pop %v1232
    %v1234 = vmul.f32 %v1124, 1.442695
    %v1235 = vpow.pop %v1234
    %v1236 = vmul.f32 %v1125, 1.442695
    %v1237 = vpow.pop %v1236
    %v1238 = vmul.f32 %v1126, 1.442695
    %v1239 = vpow.pop %v1238
    %v1240 = vmul.f32 %v1127, 1.442695
    %v1241 = vpow.pop %v1240
    %v1242 = vmul.f32 %v1128, 1.442695
    %v1243 = vpow.pop %v1242
    %v1244 = vmul.f32 %v1129, 1.442695
    %v1245 = vpow.pop %v1244
    %v1246 = vmul.f32 %v1130, 1.442695
    %v1247 = vpow.pop %v1246
    %v1248 = vmul.f32 %v1131, 1.442695
    %v1249 = vpow.pop %v1248
    %v1250 = vmul.f32 %v1132, 1.442695
    %v1251 = vpow.pop %v1250
    %v1252 = vmul.f32 %v1133, 1.442695
    %v1253 = vpow.pop %v1252
    %v1254 = vmul.f32 %v1134, 1.442695
    %v1255 = vpow.pop %v1254
    %v1256 = vmul.f32 %v1135, 1.442695
    %v1257 = vpow.pop %v1256
    %v1258 = vmul.f32 %v1136, 1.442695
    %v1259 = vpow.pop %v1258
    %v1260 = vmul.f32 %v1137, 1.442695
    %v1261 = vpow.pop %v1260
    %v1262 = vmul.f32 %v1138, 1.442695
    %v1263 = vpow.pop %v1262
    %v1264 = vmul.f32 %v1139, 1.442695
    %v1265 = vpow.pop %v1264
    %v1266 = vmul.f32 %v1140, 1.442695
    %v1267 = vpow.pop %v1266
    %v1268 = vmul.f32 %v1141, 1.442695
    %v1269 = vpow.pop %v1268
    %v1270 = vadd.f32 %v1143, %v1145
    %v1271 = vadd.f32 %v1270, %v1147
    %v1272 = vadd.f32 %v1271, %v1149
    %v1273 = vadd.f32 %v1272, %v1151
    %v1274 = vadd.f32 %v1273, %v1153
    %v1275 = vadd.f32 %v1274, %v1155
    %v1276 = vadd.f32 %v1275, %v1157
    %v1277 = vadd.f32 %v1276, %v1159
    %v1278 = vadd.f32 %v1277, %v1161
    %v1279 = vadd.f32 %v1278, %v1163
    %v1280 = vadd.f32 %v1279, %v1165
    %v1281 = vadd.f32 %v1280, %v1167
    %v1282 = vadd.f32 %v1281, %v1169
    %v1283 = vadd.f32 %v1282, %v1171
    %v1284 = vadd.f32 %v1283, %v1173
    %v1285 = vadd.f32 %v1284, %v1175
    %v1286 = vadd.f32 %v1285, %v1177
    %v1287 = vadd.f32 %v1286, %v1179
    %v1288 = vadd.f32 %v1287, %v1181
    %v1289 = vadd.f32 %v1288, %v1183
    %v1290 = vadd.f32 %v1289, %v1185
    %v1291 = vadd.f32 %v1290, %v1187
    %v1292 = vadd.f32 %v1291, %v1189
    %v1293 = vadd.f32 %v1292, %v1191
    %v1294 = vadd.f32 %v1293, %v1193
    %v1295 = vadd.f32 %v1294, %v1195
    %v1296 = vadd.f32 %v1295, %v1197
    %v1297 = vadd.f32 %v1296, %v1199
    %v1298 = vadd.f32 %v1297, %v1201
    %v1299 = vadd.f32 %v1298, %v1203
    %v1300 = vadd.f32 %v1299, %v1205
    %v1301 = vadd.f32 %v1300, %v1207
    %v1302 = vadd.f32 %v1301, %v1209
    %v1303 = vadd.f32 %v1302, %v1211
    %v1304 = vadd.f32 %v1303, %v1213
    %v1305 = vadd.f32 %v1304, %v1215
    %v1306 = vadd.f32 %v1305, %v1217
    %v1307 = vadd.f32 %v1306, %v1219
    %v1308 = vadd.f32 %v1307, %v1221
    %v1309 = vadd.f32 %v1308, %v1223
    %v1310 = vadd.f32 %v1309, %v1225
    %v1311 = vadd.f32 %v1310, %v1227
    %v1312 = vadd.f32 %v1311, %v1229
    %v1313 = vadd.f32 %v1312, %v1231
    %v1314 = vadd.f32 %v1313, %v1233
    %v1315 = vadd.f32 %v1314, %v1235
    %v1316 = vadd.f32 %v1315, %v1237
    %v1317 = vadd.f32 %v1316, %v1239
    %v1318 = vadd.f32 %v1317, %v1241
    %v1319 = vadd.f32 %v1318, %v1243
    %v1320 = vadd.f32 %v1319, %v1245
    %v1321 = vadd.f32 %v1320, %v1247
    %v1322 = vadd.f32 %v1321, %v1249
    %v1323 = vadd.f32 %v1322, %v1251
    %v1324 = vadd.f32 %v1323, %v1253
    %v1325 = vadd.f32 %v1324, %v1255
    %v1326 = vadd.f32 %v1325, %v1257
    %v1327 = vadd.f32 %v1326, %v1259
    %v1328 = vadd.f32 %v1327, %v1261
    %v1329 = vadd.f32 %v1328, %v1263
    %v1330 = vadd.f32 %v1329, %v1265
    %v1331 = vadd.f32 %v1330, %v1267
    %v1332 = vadd.f32 %v1331, %v1269
    %v1333 = vrot.slane %v1332, 4
    %v1334 = vadd.f32 %v1332, %v1333
    %v1335 = vrot.slane %v1334, 2
    %v1336 = vadd.f32 %v1334, %v1335
    %v1337 = vrot.slane %v1336, 1
    %v1338 = vadd.f32 %v1336, %v1337
    %v1339 = vadd.f32 %v1071, %v1338
    %1340 = vst [vmem:[#allocation3] sm:$0x1] %v1339
    %1341 = vst [vmem:[#allocation2] sm:$0x1] %v1066
    // Predicated region
    $region26: #{tpu_custom_call.1} parent=1 // pred_check
      %p1342 = pneg %p44
    $region27: #{tpu_custom_call.1} parent=1 // pred_check_branch
      %1344 = sbr.rel (%p1342) target = $region29
    $region28: #{tpu_custom_call.1} parent=1 // pred_region
      %v1345 = vld [vmem:[#allocation2] sm:$0x1]
      %v1346 = vld [vmem:[#allocation3] sm:$0x1]
      %v1347 = vlog2.pop %v1346
      %v1348 = vmul.f32 %v1347, 0.6931472
      %v1349 = vadd.f32 %v1345, %v1348
      %v1350 = vld [vmem:[#allocation4] sm:$0x1]
      %v1351 = vsub.f32 %v1350, %v1349
      %1352 = vst [vmem:[#allocation10] sm:$0x1] %v1351
    $region29: #{tpu_custom_call.1} parent=1 // pred_fallthru
      _
    // Predicated region
    $region30: #{tpu_custom_call.1} parent=1 // pred_check
      _
    $region31: #{tpu_custom_call.1} parent=1 // pred_check_branch
      %1354 = sbr.rel (0) target = $region33
    $region32: #{tpu_custom_call.1} parent=1 // pred_region
      %s1356 = ssub.s32 16, 16
      %1357 = vsyncadd [#allocation7], %s1356
      %s1359 = sshll.u32 [#allocation10], 4
      %s1360 = int_to_ptr.vmem [resolvable:$true] %s1359
      %1362 = dma.vmem_to_hbm [thread:$0]  %s1360, 16, %s3, [#allocation7]
    $region33: #{tpu_custom_call.1} parent=1 // pred_fallthru
      _
    // Predicated region
    $region34: #{tpu_custom_call.1} parent=1 // pred_check
      _
    $region35: #{tpu_custom_call.1} parent=1 // pred_check_branch
      %1364 = sbr.rel (0) target = $region37
    $region36: #{tpu_custom_call.1} parent=1 // pred_region
      %1365 = dma.done [#allocation7], 16
    $region37: #{tpu_custom_call.1} parent=1 // pred_fallthru
      _
    %1366 = vsyncpa [#allocation6], 1
    %1367 = vsyncpa [#allocation9], 1
    %1368 = vsyncpa [#allocation7], 1

</llo_original>
